<compile_context>
chip_gen: v7x
topology: tpu7x:2x2x1
jax: 0.10.0
libtpu: 0.0.40
codegen_flags: <defaults>
</compile_context>

<pallas_src>
import functools

import jax
import jax.numpy as jnp
from jax import lax
from jax.experimental import pallas as pl
from jax.experimental.pallas import tpu as pltpu


# ----------------------------- Pallas kernels -------------------------------

def _pairwise_dist_kernel(pcm_ref, pnm_ref, d_ref, *, ce):
    """Pairwise squared euclidean distances.

    pcm_ref: (1, Ce, N)  nodes on lanes
    pnm_ref: (1, N, Ce)  nodes on sublanes (same data, transposed in wrapper)
    d_ref  : (1, N, N)   dist[i, j] = ||p_i - p_j||^2
    """
    pc = pcm_ref[0]                                           # (Ce, N) f32
    pn = pnm_ref[0]                                           # (N, Ce) f32

    # inner[i, j] = sum_c p[c, i] * p[c, j]  -- exact f32 via per-channel
    # outer products on the VPU (Ce is tiny; avoids MXU bf16-pass rounding
    # that could perturb kNN ordering).
    inner = pn[:, 0:1] * pc[0:1, :]                           # (N, N)
    for ch in range(1, ce):
        inner = inner + pn[:, ch:ch + 1] * pc[ch:ch + 1, :]

    sq_i = jnp.sum(pn * pn, axis=1, keepdims=True)            # (N, 1)
    sq_j = jnp.sum(pc * pc, axis=0, keepdims=True)            # (1, N)
    d_ref[0] = sq_i - 2.0 * inner + sq_j


def _edgeconv_kernel(x_ref, idx_ref, w_ref, b_ref, o_ref, *, n, c, k, res_scale):
    """Fused EdgeConv2d (1x1 conv on cat[x_i, x_j - x_i] + relu + max_j) + residual.

    x_ref  : (1, C, N)    bf16 node features, nodes on lanes
    idx_ref: (1, K, N)    int32, idx[l, i] = l-th nearest neighbour of node i
    w_ref  : (2C, C)      bf16, rows [0:C] = (W1 - W2), rows [C:2C] = W2
    b_ref  : (C, 1)       f32 bias
    o_ref  : (1, C, N)    f32 output
    """
    x = x_ref[0]                                              # (C, N) bf16
    idx = idx_ref[0]                                          # (K, N) int32
    wcat = w_ref[...]                                         # (2C, C) bf16
    b = b_ref[...]                                            # (C, 1) f32

    # One fused bf16 matmul (f32 accumulation) for both terms of the 1x1 conv.
    fused = lax.dot_general(wcat, x, (((1,), (0,)), ((), ())),
                            preferred_element_type=jnp.float32)    # (2C, N)
    base = fused[:c, :] + b                                   # (W1 - W2) x_i + b
    g2 = fused[c:, :].astype(jnp.bfloat16)                    # W2 x_i (bf16 for gather)

    # Neighbour gather: per-neighbour one-hot built from the index block,
    # contracted on the MXU.  sel[j, i] = 1 iff j == idx[l, i].
    iota_j = lax.broadcasted_iota(jnp.int32, (n, n), 0)

    mx = None
    for l in range(k):                                        # K small & static
        sel = jnp.where(iota_j == idx[l:l + 1, :], 1.0, 0.0).astype(jnp.bfloat16)
        xj = lax.dot_general(g2, sel, (((1,), (0,)), ((), ())),
                             preferred_element_type=jnp.float32)   # (C, N) = W2 x_j
        h = jnp.maximum(base + xj, 0.0)                       # relu, f32
        mx = h if mx is None else jnp.maximum(mx, h)

    o_ref[0] = (mx + res_scale * x.astype(jnp.float32)).astype(o_ref.dtype)


# ------------------------------ wrapper --------------------------------------

def res_block2d(x, edge_input, weight, bias, *, k=9, res_scale=1.0):
    """ResBlock2d forward.  x: (B, C, N, 1), edge_input: (B, Ce, N, 1).

    weight: (C, 2C) -- the 1x1 Conv2d weight of BasicConv([2C, C]) squeezed.
    bias  : (C,)
    Returns (out (B, C, N, 1), dist (B, N, N), nn_idx (B, N, K)).
    """
    B, C, N, _ = x.shape
    Ce = edge_input.shape[1]

    p_cm = edge_input[..., 0].astype(jnp.float32)                       # (B, Ce, N)
    p_nm = jnp.transpose(p_cm, (0, 2, 1))                               # (B, N, Ce)

    # --- kernel 1: pairwise distances for the dense kNN graph ---
    dist = pl.pallas_call(
        functools.partial(_pairwise_dist_kernel, ce=Ce),
        out_shape=jax.ShapeDtypeStruct((B, N, N), jnp.float32),
        grid=(B,),
        in_specs=[pl.BlockSpec((1, Ce, N), lambda b: (b, 0, 0)),
                  pl.BlockSpec((1, N, Ce), lambda b: (b, 0, 0))],
        out_specs=pl.BlockSpec((1, N, N), lambda b: (b, 0, 0)),
        compiler_params=pltpu.CompilerParams(
            dimension_semantics=("parallel",),
            vmem_limit_bytes=32 * 1024 * 1024),
    )(p_cm, p_nm)

    # TODO(synk): top_k / argsort has no clean Pallas-TPU equivalent; kept in JAX.
    nn_idx = jax.lax.top_k(-dist, k)[1]                                 # (B, N, K) int32
    idx_kn = jnp.transpose(nn_idx, (0, 2, 1))                           # (B, K, N)

    # Fused weight [W1 - W2 ; W2] in bf16 (MXU inputs); bias stays f32.
    w1 = weight[:, :C].astype(jnp.float32)
    w2 = weight[:, C:].astype(jnp.float32)
    wcat = jnp.concatenate([w1 - w2, w2], axis=0).astype(jnp.bfloat16)  # (2C, C)
    b_col = bias.reshape(C, 1).astype(jnp.float32)

    x_cm = x[..., 0].astype(jnp.bfloat16)                               # (B, C, N)

    kern = functools.partial(_edgeconv_kernel, n=N, c=C, k=k,
                             res_scale=float(res_scale))
    out_cm = pl.pallas_call(
        kern,
        out_shape=jax.ShapeDtypeStruct((B, C, N), jnp.float32),
        grid=(B,),
        in_specs=[
            pl.BlockSpec((1, C, N), lambda b: (b, 0, 0)),
            pl.BlockSpec((1, k, N), lambda b: (b, 0, 0)),
            pl.BlockSpec((2 * C, C), lambda b: (0, 0)),
            pl.BlockSpec((C, 1), lambda b: (0, 0)),
        ],
        out_specs=pl.BlockSpec((1, C, N), lambda b: (b, 0, 0)),
        compiler_params=pltpu.CompilerParams(
            dimension_semantics=("parallel",),
            vmem_limit_bytes=32 * 1024 * 1024),
    )(x_cm, idx_kn, wcat, b_col)

    return out_cm[..., None], dist, nn_idx                              # (B, C, N, 1)


# --------------------------- pure-JAX reference -------------------------------

def ref_res_block2d(x, edge_input, weight, bias, *, k=9, res_scale=1.0, nn_idx=None):
    B, C, N, _ = x.shape
    p = jnp.transpose(edge_input[..., 0], (0, 2, 1))
    sq = jnp.sum(p * p, axis=-1, keepdims=True)
    inner = jnp.einsum('bnc,bmc->bnm', p, p, precision=jax.lax.Precision.HIGHEST)
    dist = sq - 2.0 * inner + jnp.swapaxes(sq, 1, 2)
    if nn_idx is None:
        nn_idx = jax.lax.top_k(-dist, k)[1]
    xn = jnp.transpose(x[..., 0], (0, 2, 1))                            # (B, N, C)
    x_j = jax.vmap(lambda xb, ib: xb[ib])(xn, nn_idx)                   # (B, N, K, C)
    x_i = jnp.broadcast_to(xn[:, :, None, :], x_j.shape)
    cat = jnp.concatenate([x_i, x_j - x_i], axis=-1)                    # (B, N, K, 2C)
    y = jnp.einsum('bnki,oi->bnko', cat, weight,
                   precision=jax.lax.Precision.HIGHEST) + bias
    y = jax.nn.relu(y)
    mx = jnp.max(y, axis=2)                                             # (B, N, C)
    out = mx + res_scale * xn
    return jnp.transpose(out, (0, 2, 1))[..., None], dist


# --------------------------------- main ---------------------------------------

if __name__ == "__main__":
    B, C, N = 2, 4, 16            # batch, in_channels, num nodes
    Ce = 3                        # edge_input feature dim (e.g. coordinates)
    K = 9                         # ResBlock2d kernel_size
    RES_SCALE = 1.0

    key = jax.random.PRNGKey(0)
    k_x, k_e, k_w, k_b = jax.random.split(key, 4)
    x = jax.random.normal(k_x, (B, C, N, 1), jnp.float32)
    edge_input = jax.random.normal(k_e, (B, Ce, N, 1), jnp.float32)
    # deterministic synthetic Conv2d(2C, C, 1, bias=True) parameters
    weight = 0.1 * jax.random.normal(k_w, (C, 2 * C), jnp.float32)
    bias = 0.1 * jax.random.normal(k_b, (C,), jnp.float32)

    out, dist, nn_idx = jax.jit(
        functools.partial(res_block2d, k=K, res_scale=RES_SCALE)
    )(x, edge_input, weight, bias)
    out = jax.block_until_ready(out)

    ref_out, ref_dist = ref_res_block2d(
        x, edge_input, weight, bias, k=K, res_scale=RES_SCALE, nn_idx=nn_idx)

    assert out.shape == (B, C, N, 1)
    # dist: exact-f32 VPU kernel vs HIGHEST-precision reference -> tight tolerance.
    assert jnp.allclose(dist, ref_dist, atol=1e-4, rtol=1e-4), "distance mismatch"
    # out: bf16 MXU inputs (x, weights) in the Pallas path vs f32 HIGHEST reference.
    assert jnp.allclose(out, ref_out, atol=2e-2, rtol=2e-2), "output mismatch"
    print("KERNEL_OK")
</pallas_src>

<mosaic_0001>
module attributes {stable_mosaic.version = 11 : i64} {
  func.func @_pairwise_dist_kernel(%arg0: i32, %arg1: memref<1x3x16xf32, #tpu.memory_space<vmem>>, %arg2: memref<1x16x3xf32, #tpu.memory_space<vmem>>, %arg3: memref<1x16x16xf32, #tpu.memory_space<vmem>>) attributes {dimension_semantics = [#tpu.dimension_semantics<parallel>], iteration_bounds = array<i64: 2>, scalar_prefetch = 0 : i64, scratch_operands = 0 : i64, tpu.core_type = #tpu.core_type<tc>, window_params = [{transform_indices = @transform_0, window_bounds = array<i64: 1, 3, 16>}, {transform_indices = @transform_1, window_bounds = array<i64: 1, 16, 3>}, {transform_indices = @transform_2, window_bounds = array<i64: 1, 16, 16>}]} {
    %c0 = arith.constant 0 : index
    %c0_0 = arith.constant 0 : index
    %c0_1 = arith.constant 0 : index
    %0 = vector.load %arg1[%c0, %c0_0, %c0_1] : memref<1x3x16xf32, #tpu.memory_space<vmem>>, vector<1x3x16xf32>
    %1 = vector.shape_cast %0 : vector<1x3x16xf32> to vector<3x16xf32>
    %c0_2 = arith.constant 0 : index
    %c0_3 = arith.constant 0 : index
    %c0_4 = arith.constant 0 : index
    %2 = vector.load %arg2[%c0_2, %c0_3, %c0_4] : memref<1x16x3xf32, #tpu.memory_space<vmem>>, vector<1x16x3xf32>
    %3 = vector.shape_cast %2 : vector<1x16x3xf32> to vector<16x3xf32>
    %4 = vector.extract_strided_slice %3 {offsets = [0, 0], sizes = [16, 1], strides = [1, 1]} : vector<16x3xf32> to vector<16x1xf32>
    %5 = vector.extract_strided_slice %1 {offsets = [0, 0], sizes = [1, 16], strides = [1, 1]} : vector<3x16xf32> to vector<1x16xf32>
    %6 = vector.broadcast %4 : vector<16x1xf32> to vector<16x16xf32>
    %7 = vector.broadcast %5 : vector<1x16xf32> to vector<16x16xf32>
    %8 = arith.mulf %6, %7 : vector<16x16xf32>
    %9 = vector.extract_strided_slice %3 {offsets = [0, 1], sizes = [16, 1], strides = [1, 1]} : vector<16x3xf32> to vector<16x1xf32>
    %10 = vector.extract_strided_slice %1 {offsets = [1, 0], sizes = [1, 16], strides = [1, 1]} : vector<3x16xf32> to vector<1x16xf32>
    %11 = vector.broadcast %9 : vector<16x1xf32> to vector<16x16xf32>
    %12 = vector.broadcast %10 : vector<1x16xf32> to vector<16x16xf32>
    %13 = arith.mulf %11, %12 : vector<16x16xf32>
    %14 = arith.addf %8, %13 : vector<16x16xf32>
    %15 = vector.extract_strided_slice %3 {offsets = [0, 2], sizes = [16, 1], strides = [1, 1]} : vector<16x3xf32> to vector<16x1xf32>
    %16 = vector.extract_strided_slice %1 {offsets = [2, 0], sizes = [1, 16], strides = [1, 1]} : vector<3x16xf32> to vector<1x16xf32>
    %17 = vector.broadcast %15 : vector<16x1xf32> to vector<16x16xf32>
    %18 = vector.broadcast %16 : vector<1x16xf32> to vector<16x16xf32>
    %19 = arith.mulf %17, %18 : vector<16x16xf32>
    %20 = arith.addf %14, %19 : vector<16x16xf32>
    %21 = arith.mulf %3, %3 : vector<16x3xf32>
    %cst = arith.constant dense<0.000000e+00> : vector<16xf32>
    %22 = vector.multi_reduction <add>, %21, %cst [1] : vector<16x3xf32> to vector<16xf32>
    %23 = vector.shape_cast %22 : vector<16xf32> to vector<16x1xf32>
    %24 = arith.mulf %1, %1 : vector<3x16xf32>
    %cst_5 = arith.constant dense<0.000000e+00> : vector<16xf32>
    %25 = vector.multi_reduction <add>, %24, %cst_5 [0] : vector<3x16xf32> to vector<16xf32>
    %26 = vector.shape_cast %25 : vector<16xf32> to vector<1x16xf32>
    %cst_6 = arith.constant 2.000000e+00 : f32
    %27 = vector.broadcast %cst_6 : f32 to vector<16x16xf32>
    %28 = arith.mulf %27, %20 : vector<16x16xf32>
    %29 = vector.broadcast %23 : vector<16x1xf32> to vector<16x16xf32>
    %30 = arith.subf %29, %28 : vector<16x16xf32>
    %31 = vector.broadcast %26 : vector<1x16xf32> to vector<16x16xf32>
    %32 = arith.addf %30, %31 : vector<16x16xf32>
    %c0_7 = arith.constant 0 : index
    %c0_8 = arith.constant 0 : index
    %c0_9 = arith.constant 0 : index
    %33 = vector.load %arg3[%c0_7, %c0_8, %c0_9] : memref<1x16x16xf32, #tpu.memory_space<vmem>>, vector<1x16x16xf32>
    %34 = vector.shape_cast %33 : vector<1x16x16xf32> to vector<16x16xf32>
    %35 = vector.shape_cast %32 : vector<16x16xf32> to vector<1x16x16xf32>
    tpu.vector_store %arg3[%c0_7, %c0_8, %c0_9], %35 {strides = array<i32>} : memref<1x16x16xf32, #tpu.memory_space<vmem>>, vector<1x16x16xf32>,
    return
  }
  func.func @transform_0(%arg0: i32) -> (i32, i32, i32) {
    %c0_i32 = arith.constant 0 : i32
    %c0_i32_0 = arith.constant 0 : i32
    %c0_i32_1 = arith.constant 0 : i32
    return %arg0, %c0_i32, %c0_i32_0 : i32, i32, i32
  }
  func.func @transform_1(%arg0: i32) -> (i32, i32, i32) {
    %c0_i32 = arith.constant 0 : i32
    %c0_i32_0 = arith.constant 0 : i32
    %c0_i32_1 = arith.constant 0 : i32
    return %arg0, %c0_i32, %c0_i32_0 : i32, i32, i32
  }
  func.func @transform_2(%arg0: i32) -> (i32, i32, i32) {
    %c0_i32 = arith.constant 0 : i32
    %c0_i32_0 = arith.constant 0 : i32
    %c0_i32_1 = arith.constant 0 : i32
    return %arg0, %c0_i32, %c0_i32_0 : i32, i32, i32
  }
}

module attributes {stable_mosaic.version = 11 : i64} {
  func.func @_edgeconv_kernel(%arg0: i32, %arg1: memref<1x4x16xbf16, #tpu.memory_space<vmem>>, %arg2: memref<1x9x16xi32, #tpu.memory_space<vmem>>, %arg3: memref<8x4xbf16, #tpu.memory_space<vmem>>, %arg4: memref<4x1xf32, #tpu.memory_space<vmem>>, %arg5: memref<1x4x16xf32, #tpu.memory_space<vmem>>) attributes {dimension_semantics = [#tpu.dimension_semantics<parallel>], iteration_bounds = array<i64: 2>, scalar_prefetch = 0 : i64, scratch_operands = 0 : i64, tpu.core_type = #tpu.core_type<tc>, window_params = [{transform_indices = @transform_0, window_bounds = array<i64: 1, 4, 16>}, {transform_indices = @transform_1, window_bounds = array<i64: 1, 9, 16>}, {pipeline_mode = #tpu.pipeline_mode<synchronous>, transform_indices = @transform_2, window_bounds = array<i64: 8, 4>}, {pipeline_mode = #tpu.pipeline_mode<synchronous>, transform_indices = @transform_3, window_bounds = array<i64: 4, 1>}, {transform_indices = @transform_4, window_bounds = array<i64: 1, 4, 16>}]} {
    %c0 = arith.constant 0 : index
    %c0_0 = arith.constant 0 : index
    %c0_1 = arith.constant 0 : index
    %0 = vector.load %arg1[%c0, %c0_0, %c0_1] : memref<1x4x16xbf16, #tpu.memory_space<vmem>>, vector<1x4x16xbf16>
    %1 = vector.shape_cast %0 : vector<1x4x16xbf16> to vector<4x16xbf16>
    %c0_2 = arith.constant 0 : index
    %c0_3 = arith.constant 0 : index
    %c0_4 = arith.constant 0 : index
    %2 = vector.load %arg2[%c0_2, %c0_3, %c0_4] : memref<1x9x16xi32, #tpu.memory_space<vmem>>, vector<1x9x16xi32>
    %3 = vector.shape_cast %2 : vector<1x9x16xi32> to vector<9x16xi32>
    %c0_5 = arith.constant 0 : index
    %c0_6 = arith.constant 0 : index
    %4 = vector.load %arg3[%c0_5, %c0_6] : memref<8x4xbf16, #tpu.memory_space<vmem>>, vector<8x4xbf16>
    %c0_7 = arith.constant 0 : index
    %c0_8 = arith.constant 0 : index
    %5 = vector.load %arg4[%c0_7, %c0_8] : memref<4x1xf32, #tpu.memory_space<vmem>>, vector<4x1xf32>
    %cst = arith.constant dense<0.000000e+00> : vector<8x16xf32>
    %6 = tpu.matmul %4, %1, %cst {dimension_numbers = #tpu.dot_dimension_numbers<[1], [0], [0], [1], [0, 0, 1, 1], [], []>} : vector<8x4xbf16>, vector<4x16xbf16>, vector<8x16xf32> -> vector<8x16xf32>
    %7 = vector.extract_strided_slice %6 {offsets = [0, 0], sizes = [4, 16], strides = [1, 1]} : vector<8x16xf32> to vector<4x16xf32>
    %8 = vector.broadcast %5 : vector<4x1xf32> to vector<4x16xf32>
    %9 = arith.addf %7, %8 : vector<4x16xf32>
    %10 = vector.extract_strided_slice %6 {offsets = [4, 0], sizes = [4, 16], strides = [1, 1]} : vector<8x16xf32> to vector<4x16xf32>
    %11 = arith.truncf %10 : vector<4x16xf32> to vector<4x16xbf16>
    %12 = tpu.iota {dimensions = array<i32: 0>} : vector<16x16xi32>
    %13 = vector.extract_strided_slice %3 {offsets = [0, 0], sizes = [1, 16], strides = [1, 1]} : vector<9x16xi32> to vector<1x16xi32>
    %14 = vector.broadcast %13 : vector<1x16xi32> to vector<16x16xi32>
    %15 = arith.cmpi eq, %12, %14 : vector<16x16xi32>
    %cst_9 = arith.constant 1.000000e+00 : f32
    %cst_10 = arith.constant 0.000000e+00 : f32
    %16 = vector.broadcast %cst_9 : f32 to vector<16x16xf32>
    %17 = vector.broadcast %cst_10 : f32 to vector<16x16xf32>
    %18 = arith.select %15, %16, %17 : vector<16x16xi1>, vector<16x16xf32>
    %19 = arith.truncf %18 : vector<16x16xf32> to vector<16x16xbf16>
    %cst_11 = arith.constant dense<0.000000e+00> : vector<4x16xf32>
    %20 = tpu.matmul %11, %19, %cst_11 {dimension_numbers = #tpu.dot_dimension_numbers<[1], [0], [0], [1], [0, 0, 1, 1], [], []>} : vector<4x16xbf16>, vector<16x16xbf16>, vector<4x16xf32> -> vector<4x16xf32>
    %21 = arith.addf %9, %20 : vector<4x16xf32>
    %cst_12 = arith.constant 0.000000e+00 : f32
    %22 = vector.broadcast %cst_12 : f32 to vector<4x16xf32>
    %23 = arith.maximumf %21, %22 : vector<4x16xf32>
    %24 = vector.extract_strided_slice %3 {offsets = [1, 0], sizes = [1, 16], strides = [1, 1]} : vector<9x16xi32> to vector<1x16xi32>
    %25 = vector.broadcast %24 : vector<1x16xi32> to vector<16x16xi32>
    %26 = arith.cmpi eq, %12, %25 : vector<16x16xi32>
    %cst_13 = arith.constant 1.000000e+00 : f32
    %cst_14 = arith.constant 0.000000e+00 : f32
    %27 = vector.broadcast %cst_13 : f32 to vector<16x16xf32>
    %28 = vector.broadcast %cst_14 : f32 to vector<16x16xf32>
    %29 = arith.select %26, %27, %28 : vector<16x16xi1>, vector<16x16xf32>
    %30 = arith.truncf %29 : vector<16x16xf32> to vector<16x16xbf16>
    %cst_15 = arith.constant dense<0.000000e+00> : vector<4x16xf32>
    %31 = tpu.matmul %11, %30, %cst_15 {dimension_numbers = #tpu.dot_dimension_numbers<[1], [0], [0], [1], [0, 0, 1, 1], [], []>} : vector<4x16xbf16>, vector<16x16xbf16>, vector<4x16xf32> -> vector<4x16xf32>
    %32 = arith.addf %9, %31 : vector<4x16xf32>
    %cst_16 = arith.constant 0.000000e+00 : f32
    %33 = vector.broadcast %cst_16 : f32 to vector<4x16xf32>
    %34 = arith.maximumf %32, %33 : vector<4x16xf32>
    %35 = arith.maximumf %23, %34 : vector<4x16xf32>
    %36 = vector.extract_strided_slice %3 {offsets = [2, 0], sizes = [1, 16], strides = [1, 1]} : vector<9x16xi32> to vector<1x16xi32>
    %37 = vector.broadcast %36 : vector<1x16xi32> to vector<16x16xi32>
    %38 = arith.cmpi eq, %12, %37 : vector<16x16xi32>
    %cst_17 = arith.constant 1.000000e+00 : f32
    %cst_18 = arith.constant 0.000000e+00 : f32
    %39 = vector.broadcast %cst_17 : f32 to vector<16x16xf32>
    %40 = vector.broadcast %cst_18 : f32 to vector<16x16xf32>
    %41 = arith.select %38, %39, %40 : vector<16x16xi1>, vector<16x16xf32>
    %42 = arith.truncf %41 : vector<16x16xf32> to vector<16x16xbf16>
    %cst_19 = arith.constant dense<0.000000e+00> : vector<4x16xf32>
    %43 = tpu.matmul %11, %42, %cst_19 {dimension_numbers = #tpu.dot_dimension_numbers<[1], [0], [0], [1], [0, 0, 1, 1], [], []>} : vector<4x16xbf16>, vector<16x16xbf16>, vector<4x16xf32> -> vector<4x16xf32>
    %44 = arith.addf %9, %43 : vector<4x16xf32>
    %cst_20 = arith.constant 0.000000e+00 : f32
    %45 = vector.broadcast %cst_20 : f32 to vector<4x16xf32>
    %46 = arith.maximumf %44, %45 : vector<4x16xf32>
    %47 = arith.maximumf %35, %46 : vector<4x16xf32>
    %48 = vector.extract_strided_slice %3 {offsets = [3, 0], sizes = [1, 16], strides = [1, 1]} : vector<9x16xi32> to vector<1x16xi32>
    %49 = vector.broadcast %48 : vector<1x16xi32> to vector<16x16xi32>
    %50 = arith.cmpi eq, %12, %49 : vector<16x16xi32>
    %cst_21 = arith.constant 1.000000e+00 : f32
    %cst_22 = arith.constant 0.000000e+00 : f32
    %51 = vector.broadcast %cst_21 : f32 to vector<16x16xf32>
    %52 = vector.broadcast %cst_22 : f32 to vector<16x16xf32>
    %53 = arith.select %50, %51, %52 : vector<16x16xi1>, vector<16x16xf32>
    %54 = arith.truncf %53 : vector<16x16xf32> to vector<16x16xbf16>
    %cst_23 = arith.constant dense<0.000000e+00> : vector<4x16xf32>
    %55 = tpu.matmul %11, %54, %cst_23 {dimension_numbers = #tpu.dot_dimension_numbers<[1], [0], [0], [1], [0, 0, 1, 1], [], []>} : vector<4x16xbf16>, vector<16x16xbf16>, vector<4x16xf32> -> vector<4x16xf32>
    %56 = arith.addf %9, %55 : vector<4x16xf32>
    %cst_24 = arith.constant 0.000000e+00 : f32
    %57 = vector.broadcast %cst_24 : f32 to vector<4x16xf32>
    %58 = arith.maximumf %56, %57 : vector<4x16xf32>
    %59 = arith.maximumf %47, %58 : vector<4x16xf32>
    %60 = vector.extract_strided_slice %3 {offsets = [4, 0], sizes = [1, 16], strides = [1, 1]} : vector<9x16xi32> to vector<1x16xi32>
    %61 = vector.broadcast %60 : vector<1x16xi32> to vector<16x16xi32>
    %62 = arith.cmpi eq, %12, %61 : vector<16x16xi32>
    %cst_25 = arith.constant 1.000000e+00 : f32
    %cst_26 = arith.constant 0.000000e+00 : f32
    %63 = vector.broadcast %cst_25 : f32 to vector<16x16xf32>
    %64 = vector.broadcast %cst_26 : f32 to vector<16x16xf32>
    %65 = arith.select %62, %63, %64 : vector<16x16xi1>, vector<16x16xf32>
    %66 = arith.truncf %65 : vector<16x16xf32> to vector<16x16xbf16>
    %cst_27 = arith.constant dense<0.000000e+00> : vector<4x16xf32>
    %67 = tpu.matmul %11, %66, %cst_27 {dimension_numbers = #tpu.dot_dimension_numbers<[1], [0], [0], [1], [0, 0, 1, 1], [], []>} : vector<4x16xbf16>, vector<16x16xbf16>, vector<4x16xf32> -> vector<4x16xf32>
    %68 = arith.addf %9, %67 : vector<4x16xf32>
    %cst_28 = arith.constant 0.000000e+00 : f32
    %69 = vector.broadcast %cst_28 : f32 to vector<4x16xf32>
    %70 = arith.maximumf %68, %69 : vector<4x16xf32>
    %71 = arith.maximumf %59, %70 : vector<4x16xf32>
    %72 = vector.extract_strided_slice %3 {offsets = [5, 0], sizes = [1, 16], strides = [1, 1]} : vector<9x16xi32> to vector<1x16xi32>
    %73 = vector.broadcast %72 : vector<1x16xi32> to vector<16x16xi32>
    %74 = arith.cmpi eq, %12, %73 : vector<16x16xi32>
    %cst_29 = arith.constant 1.000000e+00 : f32
    %cst_30 = arith.constant 0.000000e+00 : f32
    %75 = vector.broadcast %cst_29 : f32 to vector<16x16xf32>
    %76 = vector.broadcast %cst_30 : f32 to vector<16x16xf32>
    %77 = arith.select %74, %75, %76 : vector<16x16xi1>, vector<16x16xf32>
    %78 = arith.truncf %77 : vector<16x16xf32> to vector<16x16xbf16>
    %cst_31 = arith.constant dense<0.000000e+00> : vector<4x16xf32>
    %79 = tpu.matmul %11, %78, %cst_31 {dimension_numbers = #tpu.dot_dimension_numbers<[1], [0], [0], [1], [0, 0, 1, 1], [], []>} : vector<4x16xbf16>, vector<16x16xbf16>, vector<4x16xf32> -> vector<4x16xf32>
    %80 = arith.addf %9, %79 : vector<4x16xf32>
    %cst_32 = arith.constant 0.000000e+00 : f32
    %81 = vector.broadcast %cst_32 : f32 to vector<4x16xf32>
    %82 = arith.maximumf %80, %81 : vector<4x16xf32>
    %83 = arith.maximumf %71, %82 : vector<4x16xf32>
    %84 = vector.extract_strided_slice %3 {offsets = [6, 0], sizes = [1, 16], strides = [1, 1]} : vector<9x16xi32> to vector<1x16xi32>
    %85 = vector.broadcast %84 : vector<1x16xi32> to vector<16x16xi32>
    %86 = arith.cmpi eq, %12, %85 : vector<16x16xi32>
    %cst_33 = arith.constant 1.000000e+00 : f32
    %cst_34 = arith.constant 0.000000e+00 : f32
    %87 = vector.broadcast %cst_33 : f32 to vector<16x16xf32>
    %88 = vector.broadcast %cst_34 : f32 to vector<16x16xf32>
    %89 = arith.select %86, %87, %88 : vector<16x16xi1>, vector<16x16xf32>
    %90 = arith.truncf %89 : vector<16x16xf32> to vector<16x16xbf16>
    %cst_35 = arith.constant dense<0.000000e+00> : vector<4x16xf32>
    %91 = tpu.matmul %11, %90, %cst_35 {dimension_numbers = #tpu.dot_dimension_numbers<[1], [0], [0], [1], [0, 0, 1, 1], [], []>} : vector<4x16xbf16>, vector<16x16xbf16>, vector<4x16xf32> -> vector<4x16xf32>
    %92 = arith.addf %9, %91 : vector<4x16xf32>
    %cst_36 = arith.constant 0.000000e+00 : f32
    %93 = vector.broadcast %cst_36 : f32 to vector<4x16xf32>
    %94 = arith.maximumf %92, %93 : vector<4x16xf32>
    %95 = arith.maximumf %83, %94 : vector<4x16xf32>
    %96 = vector.extract_strided_slice %3 {offsets = [7, 0], sizes = [1, 16], strides = [1, 1]} : vector<9x16xi32> to vector<1x16xi32>
    %97 = vector.broadcast %96 : vector<1x16xi32> to vector<16x16xi32>
    %98 = arith.cmpi eq, %12, %97 : vector<16x16xi32>
    %cst_37 = arith.constant 1.000000e+00 : f32
    %cst_38 = arith.constant 0.000000e+00 : f32
    %99 = vector.broadcast %cst_37 : f32 to vector<16x16xf32>
    %100 = vector.broadcast %cst_38 : f32 to vector<16x16xf32>
    %101 = arith.select %98, %99, %100 : vector<16x16xi1>, vector<16x16xf32>
    %102 = arith.truncf %101 : vector<16x16xf32> to vector<16x16xbf16>
    %cst_39 = arith.constant dense<0.000000e+00> : vector<4x16xf32>
    %103 = tpu.matmul %11, %102, %cst_39 {dimension_numbers = #tpu.dot_dimension_numbers<[1], [0], [0], [1], [0, 0, 1, 1], [], []>} : vector<4x16xbf16>, vector<16x16xbf16>, vector<4x16xf32> -> vector<4x16xf32>
    %104 = arith.addf %9, %103 : vector<4x16xf32>
    %cst_40 = arith.constant 0.000000e+00 : f32
    %105 = vector.broadcast %cst_40 : f32 to vector<4x16xf32>
    %106 = arith.maximumf %104, %105 : vector<4x16xf32>
    %107 = arith.maximumf %95, %106 : vector<4x16xf32>
    %108 = vector.extract_strided_slice %3 {offsets = [8, 0], sizes = [1, 16], strides = [1, 1]} : vector<9x16xi32> to vector<1x16xi32>
    %109 = vector.broadcast %108 : vector<1x16xi32> to vector<16x16xi32>
    %110 = arith.cmpi eq, %12, %109 : vector<16x16xi32>
    %cst_41 = arith.constant 1.000000e+00 : f32
    %cst_42 = arith.constant 0.000000e+00 : f32
    %111 = vector.broadcast %cst_41 : f32 to vector<16x16xf32>
    %112 = vector.broadcast %cst_42 : f32 to vector<16x16xf32>
    %113 = arith.select %110, %111, %112 : vector<16x16xi1>, vector<16x16xf32>
    %114 = arith.truncf %113 : vector<16x16xf32> to vector<16x16xbf16>
    %cst_43 = arith.constant dense<0.000000e+00> : vector<4x16xf32>
    %115 = tpu.matmul %11, %114, %cst_43 {dimension_numbers = #tpu.dot_dimension_numbers<[1], [0], [0], [1], [0, 0, 1, 1], [], []>} : vector<4x16xbf16>, vector<16x16xbf16>, vector<4x16xf32> -> vector<4x16xf32>
    %116 = arith.addf %9, %115 : vector<4x16xf32>
    %cst_44 = arith.constant 0.000000e+00 : f32
    %117 = vector.broadcast %cst_44 : f32 to vector<4x16xf32>
    %118 = arith.maximumf %116, %117 : vector<4x16xf32>
    %119 = arith.maximumf %107, %118 : vector<4x16xf32>
    %120 = arith.extf %1 : vector<4x16xbf16> to vector<4x16xf32>
    %cst_45 = arith.constant 1.000000e+00 : f32
    %121 = vector.broadcast %cst_45 : f32 to vector<4x16xf32>
    %122 = arith.mulf %121, %120 : vector<4x16xf32>
    %123 = arith.addf %119, %122 : vector<4x16xf32>
    %c0_46 = arith.constant 0 : index
    %c0_47 = arith.constant 0 : index
    %c0_48 = arith.constant 0 : index
    %124 = vector.load %arg5[%c0_46, %c0_47, %c0_48] : memref<1x4x16xf32, #tpu.memory_space<vmem>>, vector<1x4x16xf32>
    %125 = vector.shape_cast %124 : vector<1x4x16xf32> to vector<4x16xf32>
    %126 = vector.shape_cast %123 : vector<4x16xf32> to vector<1x4x16xf32>
    tpu.vector_store %arg5[%c0_46, %c0_47, %c0_48], %126 {strides = array<i32>} : memref<1x4x16xf32, #tpu.memory_space<vmem>>, vector<1x4x16xf32>,
    return
  }
  func.func @transform_0(%arg0: i32) -> (i32, i32, i32) {
    %c0_i32 = arith.constant 0 : i32
    %c0_i32_0 = arith.constant 0 : i32
    %c0_i32_1 = arith.constant 0 : i32
    return %arg0, %c0_i32, %c0_i32_0 : i32, i32, i32
  }
  func.func @transform_1(%arg0: i32) -> (i32, i32, i32) {
    %c0_i32 = arith.constant 0 : i32
    %c0_i32_0 = arith.constant 0 : i32
    %c0_i32_1 = arith.constant 0 : i32
    return %arg0, %c0_i32, %c0_i32_0 : i32, i32, i32
  }
  func.func @transform_2(%arg0: i32) -> (i32, i32) {
    %c0_i32 = arith.constant 0 : i32
    %c0_i32_0 = arith.constant 0 : i32
    %c0_i32_1 = arith.constant 0 : i32
    return %c0_i32, %c0_i32_0 : i32, i32
  }
  func.func @transform_3(%arg0: i32) -> (i32, i32) {
    %c0_i32 = arith.constant 0 : i32
    %c0_i32_0 = arith.constant 0 : i32
    %c0_i32_1 = arith.constant 0 : i32
    return %c0_i32, %c0_i32_0 : i32, i32
  }
  func.func @transform_4(%arg0: i32) -> (i32, i32, i32) {
    %c0_i32 = arith.constant 0 : i32
    %c0_i32_0 = arith.constant 0 : i32
    %c0_i32_1 = arith.constant 0 : i32
    return %arg0, %c0_i32, %c0_i32_0 : i32, i32, i32
  }
}

</mosaic_0001>

<llo_original>
// kernel: neg.1
$region0: #{neg.1}
  #allocation0 [shape = 's32[1]{0}', space=sflag, size = 0x4, scoped, tag = 'scoped memory for neg.1']
  %s0 = inlined_call_operand.vmem [shape: f32[2,16,16], index: 0, kind: input, shape index: {}]
  %s1 = inlined_call_operand.vmem [shape: f32[2,16,16], index: 1, kind: output, shape index: {}]
  %v2 = vld [vmem:[%s0] sm:$0xff]
  %3 = xla_tuple %v2
  %4 = xla_tuple %3
  %v5 = vxor.u32 %v2, 2147483648
  %6 = xla_tuple %v5
  %7 = vst [vmem:[%s1] sm:$0xff] %v5
  %s8 = scalar_lea.vmem %s0, 16
  %v9 = vld [vmem:[%s8] sm:$0xff]
  %10 = xla_tuple %v9
  %11 = xla_tuple %10
  %v12 = vxor.u32 %v9, 2147483648
  %13 = xla_tuple %v12
  %s14 = scalar_lea.vmem %s1, 16
  %15 = vst [vmem:[%s14] sm:$0xff] %v12
  %s16 = scalar_lea.vmem %s0, 8
  %v17 = vld [vmem:[%s16] sm:$0xff]
  %18 = xla_tuple %v17
  %19 = xla_tuple %18
  %v20 = vxor.u32 %v17, 2147483648
  %21 = xla_tuple %v20
  %s22 = scalar_lea.vmem %s1, 8
  %23 = vst [vmem:[%s22] sm:$0xff] %v20
  %s24 = scalar_lea.vmem %s0, 24
  %v25 = vld [vmem:[%s24] sm:$0xff]
  %26 = xla_tuple %v25
  %27 = xla_tuple %26
  %v28 = vxor.u32 %v25, 2147483648
  %29 = xla_tuple %v28
  %s30 = scalar_lea.vmem %s1, 24
  %31 = vst [vmem:[%s30] sm:$0xff] %v28

// kernel: res_block2d.2
$region0: #{res_block2d.2}
  #allocation0 [shape = 'u32[]', space=smem, size = 0x4, offset = 0x4, fixed_abs, tag = 'smem constant byte address 0x4 - core index']
  #allocation1 [shape = 'u32[144,128]{1,0:T(1,128)}', space=vmem, size = 0x12000, scoped, tag = 'internal scratch']
  %s0 = inlined_call_operand.vmem [shape: f32[2,3,16], index: 0, kind: input, shape index: {}]
  %s1 = inlined_call_operand.vmem [shape: f32[2,16,3], index: 1, kind: input, shape index: {}]
  %s2 = inlined_call_operand.vmem [shape: f32[2,16,16], index: 2, kind: output, shape index: {}]
  %s3 = sld [smem:[#allocation0]]
  $region41: #{res_block2d.2} parent=0
    _
  %s5 = ssub.s32 1, %s3
  %s6 = scalar_select 0, %s5, %s3
  loop: start=0, step=1, limit=4
  $region2: #{res_block2d.2} parent=0 // loop_pre_header
    _
  $region3: #{res_block2d.2} parent=0 // loop_header
    %s8 = sphi 0, %s12
    %p9 = scmp.ge.s32.totalorder %s8, 4
    %s18 = sphi 0, %s20
    %s21 = sphi 0, %s18
    %s22 = sphi 0, %s21
    %s38 = sphi 0, %s22
    %s44 = sphi 0, %s46
    %s47 = sphi 0, %s44
    %s48 = sphi 0, %s47
    %s64 = sphi 0, %s48
    %s70 = sphi 0, %s72
    %s73 = sphi 0, %s70
    %s74 = sphi 0, %s73
    %s90 = sphi 0, %s74
  $region4: #{res_block2d.2} parent=0 // loop_header_branch
    %11 = sbr.rel (%p9) target = $region8
  $region5: #{res_block2d.2} parent=0 // loop_body
    %s13 = ssub.s32 %s8, 1
    %s14 = ssub.s32 %s8, 2
    %s15 = sadd.s32 %s8, 1
    %s16 = ssub.s32 %s8, %s15
    %p17 = scmp.eq.s32.totalorder %s16, 0
    %s19 = sadd.s32 %s18, 1
    %s20 = scalar_select %p17, %s18, %s19
    %p23 = pneg %p17
    %p24 = scmp.eq.s32.totalorder %s8, 1
    %p25 = por %p23, %p24
    %p26 = scmp.ne.s32.totalorder %s18, %s21
    %p27 = scmp.eq.s32.totalorder %s8, 0
    %p28 = por %p26, %p27
    %p29 = scmp.ne.s32.totalorder %s18, %s21
    %p30 = scmp.eq.s32.totalorder %s13, 1
    %p31 = por %p29, %p30
    %p32 = scmp.ne.s32.totalorder %s21, %s22
    %p33 = scmp.eq.s32.totalorder %s13, 0
    %p34 = por %p32, %p33
    %p35 = scmp.ne.s32.totalorder %s21, %s22
    %p36 = scmp.eq.s32.totalorder %s14, 1
    %p37 = por %p35, %p36
    %p39 = scmp.ne.s32.totalorder %s22, %s38
    %p40 = scmp.eq.s32.totalorder %s14, 0
    %p41 = por %p39, %p40
    %s42 = ssub.s32 %s8, %s15
    %p43 = scmp.eq.s32.totalorder %s42, 0
    %s45 = sadd.s32 %s44, 1
    %s46 = scalar_select %p43, %s44, %s45
    %p49 = pneg %p43
    %p50 = scmp.eq.s32.totalorder %s8, 1
    %p51 = por %p49, %p50
    %p52 = scmp.ne.s32.totalorder %s44, %s47
    %p53 = scmp.eq.s32.totalorder %s8, 0
    %p54 = por %p52, %p53
    %p55 = scmp.ne.s32.totalorder %s44, %s47
    %p56 = scmp.eq.s32.totalorder %s13, 1
    %p57 = por %p55, %p56
    %p58 = scmp.ne.s32.totalorder %s47, %s48
    %p59 = scmp.eq.s32.totalorder %s13, 0
    %p60 = por %p58, %p59
    %p61 = scmp.ne.s32.totalorder %s47, %s48
    %p62 = scmp.eq.s32.totalorder %s14, 1
    %p63 = por %p61, %p62
    %p65 = scmp.ne.s32.totalorder %s48, %s64
    %p66 = scmp.eq.s32.totalorder %s14, 0
    %p67 = por %p65, %p66
    %s68 = ssub.s32 %s8, %s15
    %p69 = scmp.eq.s32.totalorder %s68, 0
    %s71 = sadd.s32 %s70, 1
    %s72 = scalar_select %p69, %s70, %s71
    %p75 = pneg %p69
    %p76 = scmp.eq.s32.totalorder %s8, 1
    %p77 = por %p75, %p76
    %p78 = scmp.ne.s32.totalorder %s70, %s73
    %p79 = scmp.eq.s32.totalorder %s8, 0
    %p80 = por %p78, %p79
    %p81 = scmp.ne.s32.totalorder %s70, %s73
    %p82 = scmp.eq.s32.totalorder %s13, 1
    %p83 = por %p81, %p82
    %p84 = scmp.ne.s32.totalorder %s73, %s74
    %p85 = scmp.eq.s32.totalorder %s13, 0
    %p86 = por %p84, %p85
    %p87 = scmp.ne.s32.totalorder %s73, %s74
    %p88 = scmp.eq.s32.totalorder %s14, 1
    %p89 = por %p87, %p88
    %p91 = scmp.ne.s32.totalorder %s74, %s90
    %p92 = scmp.eq.s32.totalorder %s14, 0
    %p93 = por %p91, %p92
    %p94 = scmp.le.s32.totalorder 1, %s8
    %p95 = scmp.lt.s32.totalorder %s8, 3
    %p96 = pnand %p94, %p95
    %p97 = pneg %p96
    // Predicated region
    $region9: #{res_block2d.2} parent=5 // pred_check
      _
    $region10: #{res_block2d.2} parent=5 // pred_check_branch
      %99 = sbr.rel (%p96) target = $region12
    $region11: #{res_block2d.2} parent=5 // pred_region
      %s100 = ssub.s32 %s8, 1
    $region12: #{res_block2d.2} parent=5 // pred_fallthru
      _
    %p101 = scmp.lt.s32.totalorder %s8, 2
    // Predicated region
    $region13: #{res_block2d.2} parent=5 // pred_check
      %p102 = pneg %p101
    $region14: #{res_block2d.2} parent=5 // pred_check_branch
      %104 = sbr.rel (%p102) target = $region16
    $region15: #{res_block2d.2} parent=5 // pred_region
      // Predicated region
      $region17: #{res_block2d.2} parent=15 // pred_check
        %p105 = pneg %p28
      $region18: #{res_block2d.2} parent=15 // pred_check_branch
        %107 = sbr.rel (%p105) target = $region20
      $region19: #{res_block2d.2} parent=15 // pred_region
        %p108 = scmp.lt.s32.totalorder %s8, 1
        %s109 = scalar_select %p108, %s8, 1
        %s110 = smul.addr %s109, 4
        %s111 = scalar_lea.vmem %s0, %s110
      $region20: #{res_block2d.2} parent=15 // pred_fallthru
        _
      // Predicated region
      $region21: #{res_block2d.2} parent=15 // pred_check
        %p112 = pneg %p54
      $region22: #{res_block2d.2} parent=15 // pred_check_branch
        %114 = sbr.rel (%p112) target = $region24
      $region23: #{res_block2d.2} parent=15 // pred_region
        %p115 = scmp.lt.s32.totalorder %s8, 1
        %s116 = scalar_select %p115, %s8, 1
        %s117 = smul.addr %s116, 2
        %s118 = smul.addr %s117, 8
        %s119 = scalar_lea.vmem %s1, %s118
      $region24: #{res_block2d.2} parent=15 // pred_fallthru
        _
    $region16: #{res_block2d.2} parent=5 // pred_fallthru
      _
    %p120 = scmp.le.s32.totalorder 1, %s8
    %p121 = scmp.lt.s32.totalorder %s8, 3
    %p122 = pnand %p120, %p121
    %p123 = pneg %p122
    // Predicated region
    $region25: #{res_block2d.2} parent=5 // pred_check
      _
    $region26: #{res_block2d.2} parent=5 // pred_check_branch
      %125 = sbr.rel (%p122) target = $region28
    $region27: #{res_block2d.2} parent=5 // pred_region
      %s126 = ssub.s32 %s8, 1
      %p127 = scmp.lt.s32.totalorder %s13, 1
      %s128 = scalar_select %p127, %s13, 1
      %s129 = smul.addr %s128, 4
      %s130 = scalar_lea.vmem %s0, %s129
      %p131 = pneg %p34
      %p132 = pneg %p31
      %p133 = scmp.lt.s32.totalorder %s13, 1
      %s134 = scalar_select %p133, %s13, 1
      %s135 = smul.addr %s134, 2
      %s136 = smul.addr %s135, 8
      %s137 = scalar_lea.vmem %s1, %s136
      %p138 = pneg %p60
      %p139 = pneg %p57
      %p140 = pneg %p86
      %p141 = pneg %p83
      %p142 = scmp.lt.s32.totalorder %s13, 1
      %s143 = scalar_select %p142, %s13, 1
      %s144 = smul.addr %s143, 2
      %s145 = smul.addr %s144, 8
      %s146 = scalar_lea.vmem %s2, %s145
      %p147 = scmp.lt.s32.totalorder %s13, 1
      %s148 = scalar_select %p147, %s13, 1
      %s149 = smul.addr %s148, 4
      %s150 = scalar_lea.vmem %s0, %s149
      %p151 = scmp.lt.s32.totalorder %s13, 1
      %s152 = scalar_select %p151, %s13, 1
      %s153 = smul.addr %s152, 2
      %s154 = smul.addr %s153, 8
      %s155 = scalar_lea.vmem %s1, %s154
      %p156 = scmp.lt.s32.totalorder %s13, 1
      %s157 = scalar_select %p156, %s13, 1
      %s158 = smul.addr %s157, 2
      %s159 = smul.addr %s158, 8
      %s160 = scalar_lea.vmem %s2, %s159
      %v161 = vld [vmem:[%s150] sm:$0x7]
      %v162 = vld [vmem:[%s155] sm:$0xff]
      %v163 = vld [vmem:[%s155 + $0x8] sm:$0xff]
      %165 = vset.pattern.permute.xlu0 0
      %166 = vperm.xlu0 %165, %v162
      %v167 = vpop.permute.xlu0 %166
      %170 = vset.pattern.permute.xlu0 0
      %171 = vperm.xlu0 %170, %v163
      %v172 = vpop.permute.xlu0 %171
      %v174 = vlaneseq
      %v175 = vshrl.u32 %v174, 7
      %v176 = vsub.s32 0, %v175
      %v177 = vrot.slane %v161, %v176
      %v178 = vmul.f32 %v167, %v177
      %v179 = vmul.f32 %v172, %v177
      %180 = vset.pattern.permute.xlu0 1
      %181 = vperm.xlu0 %180, %v162
      %v182 = vpop.permute.xlu0 %181
      %184 = vset.pattern.permute.xlu0 1
      %185 = vperm.xlu0 %184, %v163
      %v186 = vpop.permute.xlu0 %185
      %v188 = vlaneseq
      %v189 = vshrl.u32 %v188, 7
      %v190 = vsub.s32 1, %v189
      %v191 = vrot.slane %v161, %v190
      %v192 = vmul.f32 %v182, %v191
      %v193 = vmul.f32 %v186, %v191
      %v194 = vadd.f32 %v178, %v192
      %v195 = vadd.f32 %v179, %v193
      %196 = vset.pattern.permute.xlu0 2
      %197 = vperm.xlu0 %196, %v162
      %v198 = vpop.permute.xlu0 %197
      %200 = vset.pattern.permute.xlu0 2
      %201 = vperm.xlu0 %200, %v163
      %v202 = vpop.permute.xlu0 %201
      %v204 = vlaneseq
      %v205 = vshrl.u32 %v204, 7
      %v206 = vsub.s32 2, %v205
      %v207 = vrot.slane %v161, %v206
      %v208 = vmul.f32 %v198, %v207
      %v209 = vmul.f32 %v202, %v207
      %v210 = vadd.f32 %v194, %v208
      %v211 = vadd.f32 %v195, %v209
      %v212 = vmul.f32 %v162, %v162
      %v213 = vmul.f32 %v163, %v163
      %vm214 = vcmask 23552
      %v215 = vsel %vm214, %v212, 0.0
      %216 = vadd.xlane.f32.xlu0 %v215
      %v217 = vpop.xlane.xlu0 %216
      %v218 = vsel %vm214, %v213, 0.0
      %219 = vadd.xlane.f32.xlu0 %v218
      %v220 = vpop.xlane.xlu0 %219
      %v221 = vmul.f32 %v161, %v161
      %vm222 = vcmask 124928
      %v223 = vsel %vm222, %v221, 0.0
      %v224 = vrot.slane %v223, 4
      %v225 = vadd.f32 %v223, %v224
      %v226 = vrot.slane %v225, 2
      %v227 = vadd.f32 %v225, %v226
      %v228 = vrot.slane %v227, 1
      %v229 = vadd.f32 %v227, %v228
      %v230 = vmul.f32 %v210, 2.0
      %v231 = vmul.f32 %v211, 2.0
      %v232 = vsub.f32 %v217, %v230
      %v233 = vsub.f32 %v220, %v231
      %v234 = vadd.f32 %v232, %v229
      %v235 = vadd.f32 %v233, %v229
      %vm236 = vcmask 130048
      %237 = vst.msk [vmem:[%s160] sm:$0xff] %vm236, %v234
      %238 = vst.msk [vmem:[%s160 + $0x8] sm:$0xff] %vm236, %v235
      %p239 = scmp.lt.s32.totalorder %s13, 1
      %s240 = scalar_select %p239, %s13, 1
      %s241 = smul.addr %s240, 2
      %s242 = smul.addr %s241, 8
      %s243 = scalar_lea.vmem %s2, %s242
      // Predicated region
      $region29: #{res_block2d.2} parent=27 // pred_check
        %p244 = pneg %p83
      $region30: #{res_block2d.2} parent=27 // pred_check_branch
        %246 = sbr.rel (%p244) target = $region32
      $region31: #{res_block2d.2} parent=27 // pred_region
        _
      $region32: #{res_block2d.2} parent=27 // pred_fallthru
        _
    $region28: #{res_block2d.2} parent=5 // pred_fallthru
      _
    %p247 = scmp.le.s32.totalorder 2, %s8
    // Predicated region
    $region33: #{res_block2d.2} parent=5 // pred_check
      %p248 = pneg %p247
    $region34: #{res_block2d.2} parent=5 // pred_check_branch
      %250 = sbr.rel (%p248) target = $region36
    $region35: #{res_block2d.2} parent=5 // pred_region
      %s251 = ssub.s32 %s8, 2
      // Predicated region
      $region37: #{res_block2d.2} parent=35 // pred_check
        %p252 = pneg %p89
      $region38: #{res_block2d.2} parent=35 // pred_check_branch
        %254 = sbr.rel (%p252) target = $region40
      $region39: #{res_block2d.2} parent=35 // pred_region
        %p255 = scmp.lt.s32.totalorder %s14, 1
        %s256 = scalar_select %p255, %s14, 1
        %s257 = smul.addr %s256, 2
        %s258 = smul.addr %s257, 8
        %s259 = scalar_lea.vmem %s2, %s258
      $region40: #{res_block2d.2} parent=35 // pred_fallthru
        _
    $region36: #{res_block2d.2} parent=5 // pred_fallthru
      _
  $region6: #{res_block2d.2} parent=0 // loop_footer
    %s12 = sadd.s32 1, %s8
  $region7: #{res_block2d.2} parent=0 // loop_footer_branch
    %7 = sbr.rel target = $region3
  $region8: #{res_block2d.2} parent=0 // loop_exit
    _

// kernel: res_block2d.3
$region0: #{res_block2d.3}
  #allocation0 [shape = 'u32[]', space=smem, size = 0x4, offset = 0x4, fixed_abs, tag = 'smem constant byte address 0x4 - core index']
  #allocation1 [shape = 'u32[144,128]{1,0:T(1,128)}', space=vmem, size = 0x12000, scoped, tag = 'internal scratch']
  %s0 = inlined_call_operand.vmem [shape: bf16[2,4,16], index: 0, kind: input, shape index: {}]
  %s1 = inlined_call_operand.vmem [shape: s32[2,9,16], index: 1, kind: input, shape index: {}]
  %s2 = inlined_call_operand.vmem [shape: bf16[8,4], index: 2, kind: input, shape index: {}]
  %s3 = inlined_call_operand.vmem [shape: f32[4,1], index: 3, kind: input, shape index: {}]
  %s4 = inlined_call_operand.hbm [shape: f32[2,4,16], index: 4, kind: output, shape index: {}]
  %s5 = sld [smem:[#allocation0]]
  $region49: #{res_block2d.3} parent=0
    _
  %s7 = ssub.s32 1, %s5
  %s8 = scalar_select 0, %s7, %s5
  $region1: #{res_block2d.3} parent=0
    #allocation2 [shape = 'u8[4096]{0}', space=vmem, size = 0x1000, scoped, tag = 'output window, operand 0']
    #allocation3 [shape = 's32[2]{0}', space=sflag, size = 0x8, scoped, tag = 'scoped memory for res_block2d.3']
    %9 = vsyncpa [#allocation3], 0
    %s10 = scalar_lea.sflag [#allocation3], 1
    %11 = vsyncpa %s10, 0
    loop: start=0, step=1, limit=4
    $region2: #{res_block2d.3} parent=1 // loop_pre_header
      _
    $region3: #{res_block2d.3} parent=1 // loop_header
      %s13 = sphi 0, %s17
      %p14 = scmp.ge.s32.totalorder %s13, 4
      %s23 = sphi 0, %s25
      %s26 = sphi 0, %s23
      %s27 = sphi 0, %s26
      %s43 = sphi 0, %s27
      %s49 = sphi 0, %s51
      %s52 = sphi 0, %s49
      %s53 = sphi 0, %s52
      %s69 = sphi 0, %s53
      %s73 = sphi 0, %s73
      %s75 = sphi 0, %s73
      %s76 = sphi 0, %s75
      %s90 = sphi 0, %s76
      %s94 = sphi 0, %s94
      %s96 = sphi 0, %s94
      %s97 = sphi 0, %s96
      %s111 = sphi 0, %s97
      %s117 = sphi 0, %s119
      %s120 = sphi 0, %s117
      %s121 = sphi 0, %s120
      %s137 = sphi 0, %s121
    $region4: #{res_block2d.3} parent=1 // loop_header_branch
      %16 = sbr.rel (%p14) target = $region8
    $region5: #{res_block2d.3} parent=1 // loop_body
      %s18 = ssub.s32 %s13, 1
      %s19 = ssub.s32 %s13, 2
      %s20 = sadd.s32 %s13, 1
      %s21 = ssub.s32 %s13, %s20
      %p22 = scmp.eq.s32.totalorder %s21, 0
      %s24 = sadd.s32 %s23, 1
      %s25 = scalar_select %p22, %s23, %s24
      %p28 = pneg %p22
      %p29 = scmp.eq.s32.totalorder %s13, 1
      %p30 = por %p28, %p29
      %p31 = scmp.ne.s32.totalorder %s23, %s26
      %p32 = scmp.eq.s32.totalorder %s13, 0
      %p33 = por %p31, %p32
      %p34 = scmp.ne.s32.totalorder %s23, %s26
      %p35 = scmp.eq.s32.totalorder %s18, 1
      %p36 = por %p34, %p35
      %p37 = scmp.ne.s32.totalorder %s26, %s27
      %p38 = scmp.eq.s32.totalorder %s18, 0
      %p39 = por %p37, %p38
      %p40 = scmp.ne.s32.totalorder %s26, %s27
      %p41 = scmp.eq.s32.totalorder %s19, 1
      %p42 = por %p40, %p41
      %p44 = scmp.ne.s32.totalorder %s27, %s43
      %p45 = scmp.eq.s32.totalorder %s19, 0
      %p46 = por %p44, %p45
      %s47 = ssub.s32 %s13, %s20
      %p48 = scmp.eq.s32.totalorder %s47, 0
      %s50 = sadd.s32 %s49, 1
      %s51 = scalar_select %p48, %s49, %s50
      %p54 = pneg %p48
      %p55 = scmp.eq.s32.totalorder %s13, 1
      %p56 = por %p54, %p55
      %p57 = scmp.ne.s32.totalorder %s49, %s52
      %p58 = scmp.eq.s32.totalorder %s13, 0
      %p59 = por %p57, %p58
      %p60 = scmp.ne.s32.totalorder %s49, %s52
      %p61 = scmp.eq.s32.totalorder %s18, 1
      %p62 = por %p60, %p61
      %p63 = scmp.ne.s32.totalorder %s52, %s53
      %p64 = scmp.eq.s32.totalorder %s18, 0
      %p65 = por %p63, %p64
      %p66 = scmp.ne.s32.totalorder %s52, %s53
      %p67 = scmp.eq.s32.totalorder %s19, 1
      %p68 = por %p66, %p67
      %p70 = scmp.ne.s32.totalorder %s53, %s69
      %p71 = scmp.eq.s32.totalorder %s19, 0
      %p72 = por %p70, %p71
      %s74 = sadd.s32 %s73, 1
      %p77 = scmp.eq.s32.totalorder %s13, 1
      %p78 = scmp.ne.s32.totalorder %s73, %s75
      %p79 = scmp.eq.s32.totalorder %s13, 0
      %p80 = por %p78, %p79
      %p81 = scmp.ne.s32.totalorder %s73, %s75
      %p82 = scmp.eq.s32.totalorder %s18, 1
      %p83 = por %p81, %p82
      %p84 = scmp.ne.s32.totalorder %s75, %s76
      %p85 = scmp.eq.s32.totalorder %s18, 0
      %p86 = por %p84, %p85
      %p87 = scmp.ne.s32.totalorder %s75, %s76
      %p88 = scmp.eq.s32.totalorder %s19, 1
      %p89 = por %p87, %p88
      %p91 = scmp.ne.s32.totalorder %s76, %s90
      %p92 = scmp.eq.s32.totalorder %s19, 0
      %p93 = por %p91, %p92
      %s95 = sadd.s32 %s94, 1
      %p98 = scmp.eq.s32.totalorder %s13, 1
      %p99 = scmp.ne.s32.totalorder %s94, %s96
      %p100 = scmp.eq.s32.totalorder %s13, 0
      %p101 = por %p99, %p100
      %p102 = scmp.ne.s32.totalorder %s94, %s96
      %p103 = scmp.eq.s32.totalorder %s18, 1
      %p104 = por %p102, %p103
      %p105 = scmp.ne.s32.totalorder %s96, %s97
      %p106 = scmp.eq.s32.totalorder %s18, 0
      %p107 = por %p105, %p106
      %p108 = scmp.ne.s32.totalorder %s96, %s97
      %p109 = scmp.eq.s32.totalorder %s19, 1
      %p110 = por %p108, %p109
      %p112 = scmp.ne.s32.totalorder %s97, %s111
      %p113 = scmp.eq.s32.totalorder %s19, 0
      %p114 = por %p112, %p113
      %s115 = ssub.s32 %s13, %s20
      %p116 = scmp.eq.s32.totalorder %s115, 0
      %s118 = sadd.s32 %s117, 1
      %s119 = scalar_select %p116, %s117, %s118
      %p122 = pneg %p116
      %p123 = scmp.eq.s32.totalorder %s13, 1
      %p124 = por %p122, %p123
      %p125 = scmp.ne.s32.totalorder %s117, %s120
      %p126 = scmp.eq.s32.totalorder %s13, 0
      %p127 = por %p125, %p126
      %p128 = scmp.ne.s32.totalorder %s117, %s120
      %p129 = scmp.eq.s32.totalorder %s18, 1
      %p130 = por %p128, %p129
      %p131 = scmp.ne.s32.totalorder %s120, %s121
      %p132 = scmp.eq.s32.totalorder %s18, 0
      %p133 = por %p131, %p132
      %p134 = scmp.ne.s32.totalorder %s120, %s121
      %p135 = scmp.eq.s32.totalorder %s19, 1
      %p136 = por %p134, %p135
      %p138 = scmp.ne.s32.totalorder %s121, %s137
      %p139 = scmp.eq.s32.totalorder %s19, 0
      %p140 = por %p138, %p139
      %p141 = scmp.le.s32.totalorder 1, %s13
      %p142 = scmp.lt.s32.totalorder %s13, 3
      %p143 = pnand %p141, %p142
      %p144 = pneg %p143
      // Predicated region
      $region9: #{res_block2d.3} parent=5 // pred_check
        _
      $region10: #{res_block2d.3} parent=5 // pred_check_branch
        %146 = sbr.rel (%p143) target = $region12
      $region11: #{res_block2d.3} parent=5 // pred_region
        %s147 = ssub.s32 %s13, 1
        // Predicated region
        $region13: #{res_block2d.3} parent=11 // pred_check
          %p148 = pneg %p86
        $region14: #{res_block2d.3} parent=11 // pred_check_branch
          %150 = sbr.rel (%p148) target = $region16
        $region15: #{res_block2d.3} parent=11 // pred_region
          _
        $region16: #{res_block2d.3} parent=11 // pred_fallthru
          _
        // Predicated region
        $region17: #{res_block2d.3} parent=11 // pred_check
          %p151 = pneg %p107
        $region18: #{res_block2d.3} parent=11 // pred_check_branch
          %153 = sbr.rel (%p151) target = $region20
        $region19: #{res_block2d.3} parent=11 // pred_region
          _
        $region20: #{res_block2d.3} parent=11 // pred_fallthru
          _
      $region12: #{res_block2d.3} parent=5 // pred_fallthru
        _
      %p154 = scmp.lt.s32.totalorder %s13, 2
      // Predicated region
      $region21: #{res_block2d.3} parent=5 // pred_check
        %p155 = pneg %p154
      $region22: #{res_block2d.3} parent=5 // pred_check_branch
        %157 = sbr.rel (%p155) target = $region24
      $region23: #{res_block2d.3} parent=5 // pred_region
        // Predicated region
        $region25: #{res_block2d.3} parent=23 // pred_check
          %p158 = pneg %p33
        $region26: #{res_block2d.3} parent=23 // pred_check_branch
          %160 = sbr.rel (%p158) target = $region28
        $region27: #{res_block2d.3} parent=23 // pred_region
          %p161 = scmp.lt.s32.totalorder %s13, 1
          %s162 = scalar_select %p161, %s13, 1
          %s163 = smul.addr %s162, 2
          %s164 = scalar_lea.vmem %s0, %s163
        $region28: #{res_block2d.3} parent=23 // pred_fallthru
          _
        // Predicated region
        $region29: #{res_block2d.3} parent=23 // pred_check
          %p165 = pneg %p59
        $region30: #{res_block2d.3} parent=23 // pred_check_branch
          %167 = sbr.rel (%p165) target = $region32
        $region31: #{res_block2d.3} parent=23 // pred_region
          %p168 = scmp.lt.s32.totalorder %s13, 1
          %s169 = scalar_select %p168, %s13, 1
          %s170 = smul.addr %s169, 2
          %s171 = smul.addr %s170, 8
          %s172 = scalar_lea.vmem %s1, %s171
        $region32: #{res_block2d.3} parent=23 // pred_fallthru
          _
      $region24: #{res_block2d.3} parent=5 // pred_fallthru
        _
      %p173 = scmp.le.s32.totalorder 1, %s13
      %p174 = scmp.lt.s32.totalorder %s13, 3
      %p175 = pnand %p173, %p174
      %p176 = pneg %p175
      // Predicated region
      $region33: #{res_block2d.3} parent=5 // pred_check
        _
      $region34: #{res_block2d.3} parent=5 // pred_check_branch
        %178 = sbr.rel (%p175) target = $region36
      $region35: #{res_block2d.3} parent=5 // pred_region
        %s179 = ssub.s32 %s13, 1
        %p180 = scmp.lt.s32.totalorder %s18, 1
        %s181 = scalar_select %p180, %s18, 1
        %s182 = smul.addr %s181, 2
        %s183 = scalar_lea.vmem %s0, %s182
        %p184 = pneg %p39
        %p185 = pneg %p36
        %p186 = scmp.lt.s32.totalorder %s18, 1
        %s187 = scalar_select %p186, %s18, 1
        %s188 = smul.addr %s187, 2
        %s189 = smul.addr %s188, 8
        %s190 = scalar_lea.vmem %s1, %s189
        %p191 = pneg %p65
        %p192 = pneg %p62
        %p193 = pneg %p86
        %p194 = pneg %p83
        %p195 = pneg %p107
        %p196 = pneg %p104
        %p197 = pneg %p133
        %p198 = pneg %p130
        %s199 = sand.u32 %s120, 1
        %s200 = scalar_lea.sflag [#allocation3], %s199
        %s201 = sand.u32 %s120, 1
        %s202 = smul.addr %s201, 4
        %s203 = scalar_lea.vmem [#allocation2], %s202
        %p204 = scmp.lt.s32.totalorder %s18, 1
        %s205 = scalar_select %p204, %s18, 1
        %s206 = smul.addr %s205, 2
        %s207 = scalar_lea.vmem %s0, %s206
        %p208 = scmp.lt.s32.totalorder %s18, 1
        %s209 = scalar_select %p208, %s18, 1
        %s210 = smul.addr %s209, 2
        %s211 = smul.addr %s210, 8
        %s212 = scalar_lea.vmem %s1, %s211
        %v214 = vld [vmem:[%s207] sm:$0x3]
        %v215 = vld [vmem:[%s212] sm:$0xff]
        %v216 = vld [vmem:[%s212 + $0x8] sm:$0x1]
        %v217 = vld [vmem:[%s2] sm:$0xf]
        %v218 = vld [vmem:[%s3] sm:$0xf]
        %vm219 = vcmask 31744
        %v221 = vsel %vm219, %v217, 0
        %vm223 = vcmask 1041408
        %v225 = vsel %vm223, %v214, 0
        %227 = vmatprep.subr.bf16.mxu0 0
        %228 = vmatpush1.bf16.msra.mxu0 %v225
        %229 = vmatprep.subr.bf16.mxu0 0
        %230 = vmatpush1.bf16.msra.mxu0 0
        %231 = vmatprep.subr.bf16.mxu0 0
        %232 = vmatpush1.bf16.msra.mxu0 0
        %233 = vmatprep.subr.bf16.mxu0 0
        %234 = vmatpush1.bf16.msra.mxu0 0
        %235 = vmatprep.subr.bf16.mxu0 0
        %236 = vmatpush1.bf16.msra.mxu0 0
        %237 = vmatprep.subr.bf16.mxu0 0
        %238 = vmatpush1.bf16.msra.mxu0 0
        %239 = vmatprep.subr.bf16.mxu0 0
        %240 = vmatpush1.bf16.msra.mxu0 0
        %241 = vmatprep.subr.bf16.mxu0 0
        %242 = vmatpush1.bf16.msra.mxu0 0
        %243 = vmatprep.subr.bf16.mxu0 0
        %244 = vmatpush1.bf16.msra.mxu0 0
        %245 = vmatprep.subr.bf16.mxu0 0
        %246 = vmatpush1.bf16.msra.mxu0 0
        %247 = vmatprep.subr.bf16.mxu0 0
        %248 = vmatpush1.bf16.msra.mxu0 0
        %249 = vmatprep.subr.bf16.mxu0 0
        %250 = vmatpush1.bf16.msra.mxu0 0
        %251 = vmatprep.subr.bf16.mxu0 0
        %252 = vmatpush1.bf16.msra.mxu0 0
        %253 = vmatprep.subr.bf16.mxu0 0
        %254 = vmatpush1.bf16.msra.mxu0 0
        %255 = vmatprep.subr.bf16.mxu0 0
        %256 = vmatpush1.bf16.msra.mxu0 0
        %257 = vmatprep.subr.bf16.mxu0 0
        %258 = vmatpush1.bf16.msra.mxu0 0
        %259 = vmatprep.mubr.bf16.mxu0 0
        %260 = vmatmul.mubr.bf16.gmra.mrb[0].mxu0 %v221
        %v261 = vpop.f32.mrb[0].mxu0
        %v262 = vadd.f32 0.0, %v261
        %v263 = vpop.f32.mrb[0].mxu0
        %v264 = vpop.f32.mrb[0].mxu0
        %v265 = vpop.f32.mrb[0].mxu0
        %266 = vdwg.mxu0
        %268 = vset.pattern.permute.xlu0 0
        %269 = vperm.xlu0 %268, %v218
        %v270 = vpop.permute.xlu0 %269
        %v272 = vadd.f32 %v262, %v270
        %v273 = vpack.c.bf16 %v262, %v262
        %v274 = vlaneseq
        %v275 = vshrl.u32 %v274, 7
        %v276 = vadd.s32 %v275, 8
        %v277 = vlaneseq
        %v278 = vshrl.u32 %v277, 7
        %v279 = vsub.s32 0, %v278
        %v280 = vrot.slane %v215, %v279
        %vm281 = vcmp.eq.s32.totalorder %v275, %v280
        %vm282 = vcmp.eq.s32.totalorder %v276, %v280
        %v283 = vsel %vm281, 1.0, 0.0
        %v284 = vsel %vm282, 1.0, 0.0
        %v285 = vpack.c.bf16 %v284, %v283
        %v287 = vrot.slane %v273, 2
        %vm288 = vcmask 130048
        %v290 = vsel %vm288, %v287, 0
        %292 = vmatprep.subr.bf16.mxu0 0
        %293 = vmatpush1.bf16.msra.mxu0 %v285
        %294 = vmatprep.subr.bf16.mxu0 0
        %295 = vmatpush1.bf16.msra.mxu0 0
        %296 = vmatprep.subr.bf16.mxu0 0
        %297 = vmatpush1.bf16.msra.mxu0 0
        %298 = vmatprep.subr.bf16.mxu0 0
        %299 = vmatpush1.bf16.msra.mxu0 0
        %300 = vmatprep.subr.bf16.mxu0 0
        %301 = vmatpush1.bf16.msra.mxu0 0
        %302 = vmatprep.subr.bf16.mxu0 0
        %303 = vmatpush1.bf16.msra.mxu0 0
        %304 = vmatprep.subr.bf16.mxu0 0
        %305 = vmatpush1.bf16.msra.mxu0 0
        %306 = vmatprep.subr.bf16.mxu0 0
        %307 = vmatpush1.bf16.msra.mxu0 0
        %308 = vmatprep.subr.bf16.mxu0 0
        %309 = vmatpush1.bf16.msra.mxu0 0
        %310 = vmatprep.subr.bf16.mxu0 0
        %311 = vmatpush1.bf16.msra.mxu0 0
        %312 = vmatprep.subr.bf16.mxu0 0
        %313 = vmatpush1.bf16.msra.mxu0 0
        %314 = vmatprep.subr.bf16.mxu0 0
        %315 = vmatpush1.bf16.msra.mxu0 0
        %316 = vmatprep.subr.bf16.mxu0 0
        %317 = vmatpush1.bf16.msra.mxu0 0
        %318 = vmatprep.subr.bf16.mxu0 0
        %319 = vmatpush1.bf16.msra.mxu0 0
        %320 = vmatprep.subr.bf16.mxu0 0
        %321 = vmatpush1.bf16.msra.mxu0 0
        %322 = vmatprep.subr.bf16.mxu0 0
        %323 = vmatpush1.bf16.msra.mxu0 0
        %324 = vmatprep.mubr.bf16.mxu0 0
        %325 = vmatmul.mubr.bf16.gmra.mrb[0].mxu0 %v290
        %v326 = vpop.f32.mrb[0].mxu0
        %v327 = vadd.f32 0.0, %v326
        %v328 = vpop.f32.mrb[0].mxu0
        %v329 = vpop.f32.mrb[0].mxu0
        %v330 = vpop.f32.mrb[0].mxu0
        %331 = vdwg.mxu0
        %v332 = vadd.f32 %v272, %v327
        %v333 = vmax.f32 %v332, 0.0
        %v334 = vlaneseq
        %v335 = vshrl.u32 %v334, 7
        %v336 = vsub.s32 1, %v335
        %v337 = vrot.slane %v215, %v336
        %vm338 = vcmp.eq.s32.totalorder %v275, %v337
        %vm339 = vcmp.eq.s32.totalorder %v276, %v337
        %v340 = vsel %vm338, 1.0, 0.0
        %v341 = vsel %vm339, 1.0, 0.0
        %v342 = vpack.c.bf16 %v341, %v340
        %343 = vmatprep.subr.bf16.mxu0 0
        %344 = vmatpush1.bf16.msra.mxu0 %v342
        %345 = vmatprep.subr.bf16.mxu0 0
        %346 = vmatpush1.bf16.msra.mxu0 0
        %347 = vmatprep.subr.bf16.mxu0 0
        %348 = vmatpush1.bf16.msra.mxu0 0
        %349 = vmatprep.subr.bf16.mxu0 0
        %350 = vmatpush1.bf16.msra.mxu0 0
        %351 = vmatprep.subr.bf16.mxu0 0
        %352 = vmatpush1.bf16.msra.mxu0 0
        %353 = vmatprep.subr.bf16.mxu0 0
        %354 = vmatpush1.bf16.msra.mxu0 0
        %355 = vmatprep.subr.bf16.mxu0 0
        %356 = vmatpush1.bf16.msra.mxu0 0
        %357 = vmatprep.subr.bf16.mxu0 0
        %358 = vmatpush1.bf16.msra.mxu0 0
        %359 = vmatprep.subr.bf16.mxu0 0
        %360 = vmatpush1.bf16.msra.mxu0 0
        %361 = vmatprep.subr.bf16.mxu0 0
        %362 = vmatpush1.bf16.msra.mxu0 0
        %363 = vmatprep.subr.bf16.mxu0 0
        %364 = vmatpush1.bf16.msra.mxu0 0
        %365 = vmatprep.subr.bf16.mxu0 0
        %366 = vmatpush1.bf16.msra.mxu0 0
        %367 = vmatprep.subr.bf16.mxu0 0
        %368 = vmatpush1.bf16.msra.mxu0 0
        %369 = vmatprep.subr.bf16.mxu0 0
        %370 = vmatpush1.bf16.msra.mxu0 0
        %371 = vmatprep.subr.bf16.mxu0 0
        %372 = vmatpush1.bf16.msra.mxu0 0
        %373 = vmatprep.subr.bf16.mxu0 0
        %374 = vmatpush1.bf16.msra.mxu0 0
        %375 = vmatprep.mubr.bf16.mxu0 0
        %376 = vmatmul.mubr.bf16.gmra.mrb[0].mxu0 %v290
        %v377 = vpop.f32.mrb[0].mxu0
        %v378 = vadd.f32 0.0, %v377
        %v379 = vpop.f32.mrb[0].mxu0
        %v380 = vpop.f32.mrb[0].mxu0
        %v381 = vpop.f32.mrb[0].mxu0
        %382 = vdwg.mxu0
        %v383 = vadd.f32 %v272, %v378
        %v384 = vmax.f32 %v383, 0.0
        %v385 = vmax.f32 %v333, %v384
        %v386 = vlaneseq
        %v387 = vshrl.u32 %v386, 7
        %v388 = vsub.s32 2, %v387
        %v389 = vrot.slane %v215, %v388
        %vm390 = vcmp.eq.s32.totalorder %v275, %v389
        %vm391 = vcmp.eq.s32.totalorder %v276, %v389
        %v392 = vsel %vm390, 1.0, 0.0
        %v393 = vsel %vm391, 1.0, 0.0
        %v394 = vpack.c.bf16 %v393, %v392
        %395 = vmatprep.subr.bf16.mxu0 0
        %396 = vmatpush1.bf16.msra.mxu0 %v394
        %397 = vmatprep.subr.bf16.mxu0 0
        %398 = vmatpush1.bf16.msra.mxu0 0
        %399 = vmatprep.subr.bf16.mxu0 0
        %400 = vmatpush1.bf16.msra.mxu0 0
        %401 = vmatprep.subr.bf16.mxu0 0
        %402 = vmatpush1.bf16.msra.mxu0 0
        %403 = vmatprep.subr.bf16.mxu0 0
        %404 = vmatpush1.bf16.msra.mxu0 0
        %405 = vmatprep.subr.bf16.mxu0 0
        %406 = vmatpush1.bf16.msra.mxu0 0
        %407 = vmatprep.subr.bf16.mxu0 0
        %408 = vmatpush1.bf16.msra.mxu0 0
        %409 = vmatprep.subr.bf16.mxu0 0
        %410 = vmatpush1.bf16.msra.mxu0 0
        %411 = vmatprep.subr.bf16.mxu0 0
        %412 = vmatpush1.bf16.msra.mxu0 0
        %413 = vmatprep.subr.bf16.mxu0 0
        %414 = vmatpush1.bf16.msra.mxu0 0
        %415 = vmatprep.subr.bf16.mxu0 0
        %416 = vmatpush1.bf16.msra.mxu0 0
        %417 = vmatprep.subr.bf16.mxu0 0
        %418 = vmatpush1.bf16.msra.mxu0 0
        %419 = vmatprep.subr.bf16.mxu0 0
        %420 = vmatpush1.bf16.msra.mxu0 0
        %421 = vmatprep.subr.bf16.mxu0 0
        %422 = vmatpush1.bf16.msra.mxu0 0
        %423 = vmatprep.subr.bf16.mxu0 0
        %424 = vmatpush1.bf16.msra.mxu0 0
        %425 = vmatprep.subr.bf16.mxu0 0
        %426 = vmatpush1.bf16.msra.mxu0 0
        %427 = vmatprep.mubr.bf16.mxu0 0
        %428 = vmatmul.mubr.bf16.gmra.mrb[0].mxu0 %v290
        %v429 = vpop.f32.mrb[0].mxu0
        %v430 = vadd.f32 0.0, %v429
        %v431 = vpop.f32.mrb[0].mxu0
        %v432 = vpop.f32.mrb[0].mxu0
        %v433 = vpop.f32.mrb[0].mxu0
        %434 = vdwg.mxu0
        %v435 = vadd.f32 %v272, %v430
        %v436 = vmax.f32 %v435, 0.0
        %v437 = vmax.f32 %v385, %v436
        %v438 = vlaneseq
        %v439 = vshrl.u32 %v438, 7
        %v440 = vsub.s32 3, %v439
        %v441 = vrot.slane %v215, %v440
        %vm442 = vcmp.eq.s32.totalorder %v275, %v441
        %vm443 = vcmp.eq.s32.totalorder %v276, %v441
        %v444 = vsel %vm442, 1.0, 0.0
        %v445 = vsel %vm443, 1.0, 0.0
        %v446 = vpack.c.bf16 %v445, %v444
        %447 = vmatprep.subr.bf16.mxu0 0
        %448 = vmatpush1.bf16.msra.mxu0 %v446
        %449 = vmatprep.subr.bf16.mxu0 0
        %450 = vmatpush1.bf16.msra.mxu0 0
        %451 = vmatprep.subr.bf16.mxu0 0
        %452 = vmatpush1.bf16.msra.mxu0 0
        %453 = vmatprep.subr.bf16.mxu0 0
        %454 = vmatpush1.bf16.msra.mxu0 0
        %455 = vmatprep.subr.bf16.mxu0 0
        %456 = vmatpush1.bf16.msra.mxu0 0
        %457 = vmatprep.subr.bf16.mxu0 0
        %458 = vmatpush1.bf16.msra.mxu0 0
        %459 = vmatprep.subr.bf16.mxu0 0
        %460 = vmatpush1.bf16.msra.mxu0 0
        %461 = vmatprep.subr.bf16.mxu0 0
        %462 = vmatpush1.bf16.msra.mxu0 0
        %463 = vmatprep.subr.bf16.mxu0 0
        %464 = vmatpush1.bf16.msra.mxu0 0
        %465 = vmatprep.subr.bf16.mxu0 0
        %466 = vmatpush1.bf16.msra.mxu0 0
        %467 = vmatprep.subr.bf16.mxu0 0
        %468 = vmatpush1.bf16.msra.mxu0 0
        %469 = vmatprep.subr.bf16.mxu0 0
        %470 = vmatpush1.bf16.msra.mxu0 0
        %471 = vmatprep.subr.bf16.mxu0 0
        %472 = vmatpush1.bf16.msra.mxu0 0
        %473 = vmatprep.subr.bf16.mxu0 0
        %474 = vmatpush1.bf16.msra.mxu0 0
        %475 = vmatprep.subr.bf16.mxu0 0
        %476 = vmatpush1.bf16.msra.mxu0 0
        %477 = vmatprep.subr.bf16.mxu0 0
        %478 = vmatpush1.bf16.msra.mxu0 0
        %479 = vmatprep.mubr.bf16.mxu0 0
        %480 = vmatmul.mubr.bf16.gmra.mrb[0].mxu0 %v290
        %v481 = vpop.f32.mrb[0].mxu0
        %v482 = vadd.f32 0.0, %v481
        %v483 = vpop.f32.mrb[0].mxu0
        %v484 = vpop.f32.mrb[0].mxu0
        %v485 = vpop.f32.mrb[0].mxu0
        %486 = vdwg.mxu0
        %v487 = vadd.f32 %v272, %v482
        %v488 = vmax.f32 %v487, 0.0
        %v489 = vmax.f32 %v437, %v488
        %v490 = vlaneseq
        %v491 = vshrl.u32 %v490, 7
        %v492 = vsub.s32 4, %v491
        %v493 = vrot.slane %v215, %v492
        %vm494 = vcmp.eq.s32.totalorder %v275, %v493
        %vm495 = vcmp.eq.s32.totalorder %v276, %v493
        %v496 = vsel %vm494, 1.0, 0.0
        %v497 = vsel %vm495, 1.0, 0.0
        %v498 = vpack.c.bf16 %v497, %v496
        %499 = vmatprep.subr.bf16.mxu0 0
        %500 = vmatpush1.bf16.msra.mxu0 %v498
        %501 = vmatprep.subr.bf16.mxu0 0
        %502 = vmatpush1.bf16.msra.mxu0 0
        %503 = vmatprep.subr.bf16.mxu0 0
        %504 = vmatpush1.bf16.msra.mxu0 0
        %505 = vmatprep.subr.bf16.mxu0 0
        %506 = vmatpush1.bf16.msra.mxu0 0
        %507 = vmatprep.subr.bf16.mxu0 0
        %508 = vmatpush1.bf16.msra.mxu0 0
        %509 = vmatprep.subr.bf16.mxu0 0
        %510 = vmatpush1.bf16.msra.mxu0 0
        %511 = vmatprep.subr.bf16.mxu0 0
        %512 = vmatpush1.bf16.msra.mxu0 0
        %513 = vmatprep.subr.bf16.mxu0 0
        %514 = vmatpush1.bf16.msra.mxu0 0
        %515 = vmatprep.subr.bf16.mxu0 0
        %516 = vmatpush1.bf16.msra.mxu0 0
        %517 = vmatprep.subr.bf16.mxu0 0
        %518 = vmatpush1.bf16.msra.mxu0 0
        %519 = vmatprep.subr.bf16.mxu0 0
        %520 = vmatpush1.bf16.msra.mxu0 0
        %521 = vmatprep.subr.bf16.mxu0 0
        %522 = vmatpush1.bf16.msra.mxu0 0
        %523 = vmatprep.subr.bf16.mxu0 0
        %524 = vmatpush1.bf16.msra.mxu0 0
        %525 = vmatprep.subr.bf16.mxu0 0
        %526 = vmatpush1.bf16.msra.mxu0 0
        %527 = vmatprep.subr.bf16.mxu0 0
        %528 = vmatpush1.bf16.msra.mxu0 0
        %529 = vmatprep.subr.bf16.mxu0 0
        %530 = vmatpush1.bf16.msra.mxu0 0
        %531 = vmatprep.mubr.bf16.mxu0 0
        %532 = vmatmul.mubr.bf16.gmra.mrb[0].mxu0 %v290
        %v533 = vpop.f32.mrb[0].mxu0
        %v534 = vadd.f32 0.0, %v533
        %v535 = vpop.f32.mrb[0].mxu0
        %v536 = vpop.f32.mrb[0].mxu0
        %v537 = vpop.f32.mrb[0].mxu0
        %538 = vdwg.mxu0
        %v539 = vadd.f32 %v272, %v534
        %v540 = vmax.f32 %v539, 0.0
        %v541 = vmax.f32 %v489, %v540
        %v542 = vlaneseq
        %v543 = vshrl.u32 %v542, 7
        %v544 = vsub.s32 5, %v543
        %v545 = vrot.slane %v215, %v544
        %vm546 = vcmp.eq.s32.totalorder %v275, %v545
        %vm547 = vcmp.eq.s32.totalorder %v276, %v545
        %v548 = vsel %vm546, 1.0, 0.0
        %v549 = vsel %vm547, 1.0, 0.0
        %v550 = vpack.c.bf16 %v549, %v548
        %551 = vmatprep.subr.bf16.mxu0 0
        %552 = vmatpush1.bf16.msra.mxu0 %v550
        %553 = vmatprep.subr.bf16.mxu0 0
        %554 = vmatpush1.bf16.msra.mxu0 0
        %555 = vmatprep.subr.bf16.mxu0 0
        %556 = vmatpush1.bf16.msra.mxu0 0
        %557 = vmatprep.subr.bf16.mxu0 0
        %558 = vmatpush1.bf16.msra.mxu0 0
        %559 = vmatprep.subr.bf16.mxu0 0
        %560 = vmatpush1.bf16.msra.mxu0 0
        %561 = vmatprep.subr.bf16.mxu0 0
        %562 = vmatpush1.bf16.msra.mxu0 0
        %563 = vmatprep.subr.bf16.mxu0 0
        %564 = vmatpush1.bf16.msra.mxu0 0
        %565 = vmatprep.subr.bf16.mxu0 0
        %566 = vmatpush1.bf16.msra.mxu0 0
        %567 = vmatprep.subr.bf16.mxu0 0
        %568 = vmatpush1.bf16.msra.mxu0 0
        %569 = vmatprep.subr.bf16.mxu0 0
        %570 = vmatpush1.bf16.msra.mxu0 0
        %571 = vmatprep.subr.bf16.mxu0 0
        %572 = vmatpush1.bf16.msra.mxu0 0
        %573 = vmatprep.subr.bf16.mxu0 0
        %574 = vmatpush1.bf16.msra.mxu0 0
        %575 = vmatprep.subr.bf16.mxu0 0
        %576 = vmatpush1.bf16.msra.mxu0 0
        %577 = vmatprep.subr.bf16.mxu0 0
        %578 = vmatpush1.bf16.msra.mxu0 0
        %579 = vmatprep.subr.bf16.mxu0 0
        %580 = vmatpush1.bf16.msra.mxu0 0
        %581 = vmatprep.subr.bf16.mxu0 0
        %582 = vmatpush1.bf16.msra.mxu0 0
        %583 = vmatprep.mubr.bf16.mxu0 0
        %584 = vmatmul.mubr.bf16.gmra.mrb[0].mxu0 %v290
        %v585 = vpop.f32.mrb[0].mxu0
        %v586 = vadd.f32 0.0, %v585
        %v587 = vpop.f32.mrb[0].mxu0
        %v588 = vpop.f32.mrb[0].mxu0
        %v589 = vpop.f32.mrb[0].mxu0
        %590 = vdwg.mxu0
        %v591 = vadd.f32 %v272, %v586
        %v592 = vmax.f32 %v591, 0.0
        %v593 = vmax.f32 %v541, %v592
        %v594 = vlaneseq
        %v595 = vshrl.u32 %v594, 7
        %v596 = vsub.s32 6, %v595
        %v597 = vrot.slane %v215, %v596
        %vm598 = vcmp.eq.s32.totalorder %v275, %v597
        %vm599 = vcmp.eq.s32.totalorder %v276, %v597
        %v600 = vsel %vm598, 1.0, 0.0
        %v601 = vsel %vm599, 1.0, 0.0
        %v602 = vpack.c.bf16 %v601, %v600
        %603 = vmatprep.subr.bf16.mxu0 0
        %604 = vmatpush1.bf16.msra.mxu0 %v602
        %605 = vmatprep.subr.bf16.mxu0 0
        %606 = vmatpush1.bf16.msra.mxu0 0
        %607 = vmatprep.subr.bf16.mxu0 0
        %608 = vmatpush1.bf16.msra.mxu0 0
        %609 = vmatprep.subr.bf16.mxu0 0
        %610 = vmatpush1.bf16.msra.mxu0 0
        %611 = vmatprep.subr.bf16.mxu0 0
        %612 = vmatpush1.bf16.msra.mxu0 0
        %613 = vmatprep.subr.bf16.mxu0 0
        %614 = vmatpush1.bf16.msra.mxu0 0
        %615 = vmatprep.subr.bf16.mxu0 0
        %616 = vmatpush1.bf16.msra.mxu0 0
        %617 = vmatprep.subr.bf16.mxu0 0
        %618 = vmatpush1.bf16.msra.mxu0 0
        %619 = vmatprep.subr.bf16.mxu0 0
        %620 = vmatpush1.bf16.msra.mxu0 0
        %621 = vmatprep.subr.bf16.mxu0 0
        %622 = vmatpush1.bf16.msra.mxu0 0
        %623 = vmatprep.subr.bf16.mxu0 0
        %624 = vmatpush1.bf16.msra.mxu0 0
        %625 = vmatprep.subr.bf16.mxu0 0
        %626 = vmatpush1.bf16.msra.mxu0 0
        %627 = vmatprep.subr.bf16.mxu0 0
        %628 = vmatpush1.bf16.msra.mxu0 0
        %629 = vmatprep.subr.bf16.mxu0 0
        %630 = vmatpush1.bf16.msra.mxu0 0
        %631 = vmatprep.subr.bf16.mxu0 0
        %632 = vmatpush1.bf16.msra.mxu0 0
        %633 = vmatprep.subr.bf16.mxu0 0
        %634 = vmatpush1.bf16.msra.mxu0 0
        %635 = vmatprep.mubr.bf16.mxu0 0
        %636 = vmatmul.mubr.bf16.gmra.mrb[0].mxu0 %v290
        %v637 = vpop.f32.mrb[0].mxu0
        %v638 = vadd.f32 0.0, %v637
        %v639 = vpop.f32.mrb[0].mxu0
        %v640 = vpop.f32.mrb[0].mxu0
        %v641 = vpop.f32.mrb[0].mxu0
        %642 = vdwg.mxu0
        %v643 = vadd.f32 %v272, %v638
        %v644 = vmax.f32 %v643, 0.0
        %v645 = vmax.f32 %v593, %v644
        %v646 = vlaneseq
        %v647 = vshrl.u32 %v646, 7
        %v648 = vsub.s32 7, %v647
        %v649 = vrot.slane %v215, %v648
        %vm650 = vcmp.eq.s32.totalorder %v275, %v649
        %vm651 = vcmp.eq.s32.totalorder %v276, %v649
        %v652 = vsel %vm650, 1.0, 0.0
        %v653 = vsel %vm651, 1.0, 0.0
        %v654 = vpack.c.bf16 %v653, %v652
        %655 = vmatprep.subr.bf16.mxu0 0
        %656 = vmatpush1.bf16.msra.mxu0 %v654
        %657 = vmatprep.subr.bf16.mxu0 0
        %658 = vmatpush1.bf16.msra.mxu0 0
        %659 = vmatprep.subr.bf16.mxu0 0
        %660 = vmatpush1.bf16.msra.mxu0 0
        %661 = vmatprep.subr.bf16.mxu0 0
        %662 = vmatpush1.bf16.msra.mxu0 0
        %663 = vmatprep.subr.bf16.mxu0 0
        %664 = vmatpush1.bf16.msra.mxu0 0
        %665 = vmatprep.subr.bf16.mxu0 0
        %666 = vmatpush1.bf16.msra.mxu0 0
        %667 = vmatprep.subr.bf16.mxu0 0
        %668 = vmatpush1.bf16.msra.mxu0 0
        %669 = vmatprep.subr.bf16.mxu0 0
        %670 = vmatpush1.bf16.msra.mxu0 0
        %671 = vmatprep.subr.bf16.mxu0 0
        %672 = vmatpush1.bf16.msra.mxu0 0
        %673 = vmatprep.subr.bf16.mxu0 0
        %674 = vmatpush1.bf16.msra.mxu0 0
        %675 = vmatprep.subr.bf16.mxu0 0
        %676 = vmatpush1.bf16.msra.mxu0 0
        %677 = vmatprep.subr.bf16.mxu0 0
        %678 = vmatpush1.bf16.msra.mxu0 0
        %679 = vmatprep.subr.bf16.mxu0 0
        %680 = vmatpush1.bf16.msra.mxu0 0
        %681 = vmatprep.subr.bf16.mxu0 0
        %682 = vmatpush1.bf16.msra.mxu0 0
        %683 = vmatprep.subr.bf16.mxu0 0
        %684 = vmatpush1.bf16.msra.mxu0 0
        %685 = vmatprep.subr.bf16.mxu0 0
        %686 = vmatpush1.bf16.msra.mxu0 0
        %687 = vmatprep.mubr.bf16.mxu0 0
        %688 = vmatmul.mubr.bf16.gmra.mrb[0].mxu0 %v290
        %v689 = vpop.f32.mrb[0].mxu0
        %v690 = vadd.f32 0.0, %v689
        %v691 = vpop.f32.mrb[0].mxu0
        %v692 = vpop.f32.mrb[0].mxu0
        %v693 = vpop.f32.mrb[0].mxu0
        %694 = vdwg.mxu0
        %v695 = vadd.f32 %v272, %v690
        %v696 = vmax.f32 %v695, 0.0
        %v697 = vmax.f32 %v645, %v696
        %v698 = vlaneseq
        %v699 = vshrl.u32 %v698, 7
        %v700 = vsub.s32 0, %v699
        %v701 = vrot.slane %v216, %v700
        %vm702 = vcmp.eq.s32.totalorder %v275, %v701
        %vm703 = vcmp.eq.s32.totalorder %v276, %v701
        %v704 = vsel %vm702, 1.0, 0.0
        %v705 = vsel %vm703, 1.0, 0.0
        %v706 = vpack.c.bf16 %v705, %v704
        %707 = vmatprep.subr.bf16.mxu0 0
        %708 = vmatpush1.bf16.msra.mxu0 %v706
        %709 = vmatprep.subr.bf16.mxu0 0
        %710 = vmatpush1.bf16.msra.mxu0 0
        %711 = vmatprep.subr.bf16.mxu0 0
        %712 = vmatpush1.bf16.msra.mxu0 0
        %713 = vmatprep.subr.bf16.mxu0 0
        %714 = vmatpush1.bf16.msra.mxu0 0
        %715 = vmatprep.subr.bf16.mxu0 0
        %716 = vmatpush1.bf16.msra.mxu0 0
        %717 = vmatprep.subr.bf16.mxu0 0
        %718 = vmatpush1.bf16.msra.mxu0 0
        %719 = vmatprep.subr.bf16.mxu0 0
        %720 = vmatpush1.bf16.msra.mxu0 0
        %721 = vmatprep.subr.bf16.mxu0 0
        %722 = vmatpush1.bf16.msra.mxu0 0
        %723 = vmatprep.subr.bf16.mxu0 0
        %724 = vmatpush1.bf16.msra.mxu0 0
        %725 = vmatprep.subr.bf16.mxu0 0
        %726 = vmatpush1.bf16.msra.mxu0 0
        %727 = vmatprep.subr.bf16.mxu0 0
        %728 = vmatpush1.bf16.msra.mxu0 0
        %729 = vmatprep.subr.bf16.mxu0 0
        %730 = vmatpush1.bf16.msra.mxu0 0
        %731 = vmatprep.subr.bf16.mxu0 0
        %732 = vmatpush1.bf16.msra.mxu0 0
        %733 = vmatprep.subr.bf16.mxu0 0
        %734 = vmatpush1.bf16.msra.mxu0 0
        %735 = vmatprep.subr.bf16.mxu0 0
        %736 = vmatpush1.bf16.msra.mxu0 0
        %737 = vmatprep.subr.bf16.mxu0 0
        %738 = vmatpush1.bf16.msra.mxu0 0
        %739 = vmatprep.mubr.bf16.mxu0 0
        %740 = vmatmul.mubr.bf16.gmra.mrb[0].mxu0 %v290
        %v741 = vpop.f32.mrb[0].mxu0
        %v742 = vadd.f32 0.0, %v741
        %v743 = vpop.f32.mrb[0].mxu0
        %v744 = vpop.f32.mrb[0].mxu0
        %v745 = vpop.f32.mrb[0].mxu0
        %746 = vdwg.mxu0
        %v747 = vadd.f32 %v272, %v742
        %v748 = vmax.f32 %v747, 0.0
        %v749 = vmax.f32 %v697, %v748
        %v750 = vunpack.c.l.bf16 %v214
        %v751 = vadd.f32 %v749, %v750
        %vm752 = vcmask 125952
        %753 = vst.msk [vmem:[%s203] sm:$0xf] %vm752, %v751
        %s754 = sand.u32 %s120, 1
        %s755 = scalar_lea.sflag [#allocation3], %s754
        %s756 = sand.u32 %s120, 1
        %s757 = smul.addr %s756, 4
        %s758 = scalar_lea.vmem [#allocation2], %s757
        // Predicated region
        $region37: #{res_block2d.3} parent=35 // pred_check
          %p759 = pneg %p130
        $region38: #{res_block2d.3} parent=35 // pred_check_branch
          %761 = sbr.rel (%p759) target = $region40
        $region39: #{res_block2d.3} parent=35 // pred_region
          %s763 = ssub.s32 64, 64
          %764 = vsyncadd %s755, %s763
          %s765 = smul.addr %s18, 64
          %s766 = scalar_lea.hbm %s4, %s765
          %s768 = sshll.u32 %s758, 4
          %s769 = int_to_ptr.vmem [resolvable:$true] %s768
          %771 = dma.vmem_to_hbm [thread:$0]  %s769, 64, %s766, %s755
        $region40: #{res_block2d.3} parent=35 // pred_fallthru
          _
      $region36: #{res_block2d.3} parent=5 // pred_fallthru
        _
      %p772 = scmp.le.s32.totalorder 2, %s13
      // Predicated region
      $region41: #{res_block2d.3} parent=5 // pred_check
        %p773 = pneg %p772
      $region42: #{res_block2d.3} parent=5 // pred_check_branch
        %775 = sbr.rel (%p773) target = $region44
      $region43: #{res_block2d.3} parent=5 // pred_region
        %s776 = ssub.s32 %s13, 2
        // Predicated region
        $region45: #{res_block2d.3} parent=43 // pred_check
          %p777 = pneg %p136
        $region46: #{res_block2d.3} parent=43 // pred_check_branch
          %779 = sbr.rel (%p777) target = $region48
        $region47: #{res_block2d.3} parent=43 // pred_region
          %s780 = sand.u32 %s121, 1
          %s781 = scalar_lea.sflag [#allocation3], %s780
          %s782 = sand.u32 %s121, 1
          %s783 = smul.addr %s782, 4
          %s784 = scalar_lea.vmem [#allocation2], %s783
          %785 = dma.done %s781, 64
        $region48: #{res_block2d.3} parent=43 // pred_fallthru
          _
      $region44: #{res_block2d.3} parent=5 // pred_fallthru
        _
    $region6: #{res_block2d.3} parent=1 // loop_footer
      %s17 = sadd.s32 1, %s13
    $region7: #{res_block2d.3} parent=1 // loop_footer_branch
      %12 = sbr.rel target = $region3
    $region8: #{res_block2d.3} parent=1 // loop_exit
      _
    %786 = vsyncpa [#allocation3], 1
    %s787 = scalar_lea.sflag [#allocation3], 1
    %788 = vsyncpa %s787, 1

</llo_original>
